<compile_context>
chip_gen: v6e
topology: v6e:2x2x1
jax: 0.10.0
libtpu: 0.0.40
codegen_flags: <defaults>
</compile_context>

<pallas_src>
import jax
import jax.numpy as jnp
from jax.experimental import pallas as pl
from jax.experimental.pallas import tpu as pltpu

_H1 = 1024      # first hidden width
_H2 = 256       # second hidden width
_HC = 256       # H1 chunk width for the fused layer-1/2 loop
_LANES = 128    # lane width for the compact output


def _round_up(x, m):
    return (x + m - 1) // m * m


def _cdiv(a, b):
    return (a + b - 1) // b


def _discrimentor_kernel(x_ref, w1_ref, b1_ref, w2_ref, b2_ref, w3_ref, b3_ref,
                         o_ref):
    """Fused 3-layer MLP + sigmoid for one batch tile.

    x arrives as f32 and is cast to bf16 here (MXU operands); accumulation and
    all elementwise math (bias, ReLU, sigmoid) stay in float32.  GRL is
    identity in forward; Dropout(0.6) is eval-mode identity.
    """
    x = x_ref[...].astype(jnp.bfloat16)            # (block_b, in_feature)
    block_b = x.shape[0]

    # Layers 1+2 fused over H1 chunks: never materialize the full
    # (block_b, 1024) f32 h1 (cuts VMEM residency and spill stores; matters
    # most on v5e's single vst slot).  Fully unrolled: 4 static iterations
    # with static (zero-cost) ref slices.
    acc = jnp.zeros((block_b, _H2), jnp.float32)
    for c in range(_H1 // _HC):
        lo = c * _HC
        # Layer-1 chunk: Linear(in_feature, 256 cols of 1024) + ReLU (MXU).
        h1_c = jnp.dot(x, w1_ref[:, lo:lo + _HC],
                       preferred_element_type=jnp.float32)
        h1_c = jnp.maximum(h1_c + b1_ref[:, lo:lo + _HC], 0.0)
        # Dropout(0.6): identity in eval mode.
        # Layer-2 partial: accumulate the matching 256-row slice of w2 (MXU).
        acc = acc + jnp.dot(h1_c.astype(jnp.bfloat16), w2_ref[lo:lo + _HC, :],
                            preferred_element_type=jnp.float32)

    h2 = jnp.maximum(acc + b2_ref[...], 0.0)       # (block_b, 256)
    # Dropout(0.6): identity in eval mode.

    # Layer 3: Linear(256, 1) + Sigmoid — N=1 matmul replaced by a VPU multiply
    # + cross-lane reduction (keeps the MXU out of a 1-lane-wide push/pop).
    logits = jnp.sum(h2 * w3_ref[...], axis=-1, keepdims=True) + b3_ref[0, 0]
    sig = jax.nn.sigmoid(logits)                   # (block_b, 1) f32

    # Compact lane-dense store: fold the batch column into (block_b//128, 128)
    # so stores are full unmasked vst tiles and HBM writeback is 4 B/row.
    o_ref[...] = sig.reshape(o_ref.shape).astype(o_ref.dtype)


def _choose_tiling(B, in_feature):
    """Pick (num_tiles, block_b) with block_b a multiple of 128."""
    # Cap block_b so two f32 x buffers stay <= ~8 MiB even for large in_feature.
    max_block = (4 * 2**20) // max(4 * in_feature, 1)
    max_block = max(128, min(1024, (max_block // 128) * 128))
    num_tiles = _cdiv(B, max_block)
    if B >= 256:
        num_tiles = max(num_tiles, 2)   # v7x: give both TensorCores grid steps
    block_b = _round_up(_cdiv(B, num_tiles), _LANES)
    return num_tiles, block_b


@jax.jit
def discrimentor_forward(x, params):
    """Runs the fused discriminator MLP as a single Pallas kernel.

    x: [B, in_feature] float32 (any B; padded internally).
    params: dict of w1,b1,w2,b2,w3,b3 (weights stored [in, out], biases [1, out]).
    Returns: [B, 1] float32 sigmoid probabilities.
    """
    B, in_feature = x.shape
    num_tiles, block_b = _choose_tiling(B, in_feature)
    B_pad = num_tiles * block_b
    if B_pad != B:
        x = jnp.pad(x, ((0, B_pad - B), (0, 0)))

    # Weight casts amortize in the wrapper; x is passed f32 (cast in-kernel).
    w1 = params["w1"].astype(jnp.bfloat16)                       # [in, 1024]
    w2 = params["w2"].astype(jnp.bfloat16)                       # [1024, 256]
    b1 = params["b1"].astype(jnp.float32)                        # [1, 1024]
    b2 = params["b2"].astype(jnp.float32)                        # [1, 256]
    w3_row = params["w3"].reshape(1, _H2).astype(jnp.float32)    # [1, 256]
    b3 = params["b3"].reshape(1, 1).astype(jnp.float32)          # [1, 1]

    const_buf = pl.Buffered(1)   # weights: constant block index across the grid
    in_specs = [
        pl.BlockSpec((block_b, in_feature), lambda i: (i, 0)),             # x
        pl.BlockSpec((in_feature, _H1), lambda i: (0, 0),
                     pipeline_mode=const_buf),                             # w1
        pl.BlockSpec((1, _H1), lambda i: (0, 0)),                          # b1
        pl.BlockSpec((_H1, _H2), lambda i: (0, 0),
                     pipeline_mode=const_buf),                             # w2
        pl.BlockSpec((1, _H2), lambda i: (0, 0)),                          # b2
        pl.BlockSpec((1, _H2), lambda i: (0, 0)),                          # w3
        pl.BlockSpec(memory_space=pltpu.MemorySpace.SMEM),                 # b3
    ]
    out_rows = block_b // _LANES
    out_spec = pl.BlockSpec((out_rows, _LANES), lambda i: (i, 0))

    # Explicit scoped-VMEM limit from the actual buffer sizes (2x headroom,
    # >= 8 MiB floor, <= 64 MiB cap so it is valid on v7x).
    bpe16, bpe32 = 2, 4
    weight_vmem = (in_feature * _H1 * bpe16 + _H1 * _H2 * bpe16      # w1, w2 (x1)
                   + 8 * _H1 * bpe32 + 2 * 8 * _H2 * bpe32)          # b1,b2,w3 pads
    io_vmem = 2 * block_b * in_feature * bpe32 + 2 * out_rows * _LANES * bpe32
    temp_vmem = block_b * (in_feature * bpe16                         # x bf16
                           + _HC * (bpe32 + bpe16)                    # h1 chunk
                           + 2 * _H2 * bpe32)                         # acc + h2
    vmem_limit = int(min(64 * 2**20,
                         max(2 * (weight_vmem + io_vmem + temp_vmem), 8 * 2**20)))

    flops = 2 * B_pad * (in_feature * _H1 + _H1 * _H2 + _H2)
    bytes_accessed = (B_pad * in_feature * bpe32
                      + w1.size * bpe16 + w2.size * bpe16
                      + (b1.size + b2.size + w3_row.size + b3.size) * bpe32
                      + B_pad * bpe32)
    cost = pl.CostEstimate(flops=flops, transcendentals=B_pad,
                           bytes_accessed=bytes_accessed)

    out = pl.pallas_call(
        _discrimentor_kernel,
        out_shape=jax.ShapeDtypeStruct((B_pad // _LANES, _LANES), jnp.float32),
        grid_spec=pltpu.PrefetchScalarGridSpec(
            num_scalar_prefetch=0,
            grid=(num_tiles,),
            in_specs=in_specs,
            out_specs=out_spec,
        ),
        compiler_params=pltpu.CompilerParams(
            dimension_semantics=("parallel",),
            vmem_limit_bytes=vmem_limit),
        cost_estimate=cost,
    )(x, w1, b1, w2, b2, w3_row, b3)

    # Flatten the (B_pad//128, 128) slab back to a [B, 1] column.
    return out.reshape(-1)[:B, None]


def init_params(key, in_feature):
    """Deterministic PyTorch-style Linear init (uniform ±1/sqrt(fan_in))."""
    dims = [(in_feature, _H1), (_H1, _H2), (_H2, 1)]
    params = {}
    for idx, (fan_in, fan_out) in enumerate(dims, start=1):
        key, kw, kb = jax.random.split(key, 3)
        bound = 1.0 / jnp.sqrt(jnp.float32(fan_in))
        params[f"w{idx}"] = jax.random.uniform(
            kw, (fan_in, fan_out), jnp.float32, -bound, bound)
        params[f"b{idx}"] = jax.random.uniform(
            kb, (1, fan_out), jnp.float32, -bound, bound)
    return params


def reference_forward_f32(x, params):
    """Pure-JAX f32 reference (eval-mode semantics)."""
    h1 = jnp.maximum(x @ params["w1"] + params["b1"], 0.0)
    h2 = jnp.maximum(h1 @ params["w2"] + params["b2"], 0.0)
    return jax.nn.sigmoid(h2 @ params["w3"] + params["b3"])


def reference_forward_bf16(x, params):
    """Pure-JAX reference mirroring the kernel's bf16-operand / f32-accum path."""
    h1 = jnp.dot(x.astype(jnp.bfloat16), params["w1"].astype(jnp.bfloat16),
                 preferred_element_type=jnp.float32) + params["b1"]
    h1 = jnp.maximum(h1, 0.0)
    h2 = jnp.dot(h1.astype(jnp.bfloat16), params["w2"].astype(jnp.bfloat16),
                 preferred_element_type=jnp.float32) + params["b2"]
    h2 = jnp.maximum(h2, 0.0)
    return jax.nn.sigmoid(h2 @ params["w3"] + params["b3"])


if __name__ == "__main__":
    # TODO(synk): GradientReverseModule only affects the backward pass (identity
    # forward); a custom_vjp outside the kernel would be needed for training.
    key = jax.random.PRNGKey(0)
    key, kx = jax.random.split(key)

    batch, in_feature = 16, 32
    x = jax.random.normal(kx, (batch, in_feature), jnp.float32)
    params = init_params(key, in_feature)

    y = discrimentor_forward(x, params)
    y = jax.block_until_ready(y)
    assert y.shape == (batch, 1)

    # Tight check against a reference that mimics the kernel's bf16 matmuls.
    y_bf_ref = reference_forward_bf16(x, params)
    assert jnp.allclose(y, y_bf_ref, atol=1e-3, rtol=1e-3), (
        float(jnp.max(jnp.abs(y - y_bf_ref))))

    # Loose sanity check against the full-f32 reference (bf16 operand error).
    y_f32_ref = reference_forward_f32(x, params)
    assert jnp.allclose(y, y_f32_ref, atol=3e-2, rtol=3e-2), (
        float(jnp.max(jnp.abs(y - y_f32_ref))))

    print("KERNEL_OK")
</pallas_src>

<mosaic_0001>
module attributes {stable_mosaic.version = 11 : i64} {
  func.func @_discrimentor_kernel(%arg0: i32, %arg1: memref<128x32xf32, #tpu.memory_space<vmem>>, %arg2: memref<32x1024xbf16, #tpu.memory_space<vmem>>, %arg3: memref<1x1024xf32, #tpu.memory_space<vmem>>, %arg4: memref<1024x256xbf16, #tpu.memory_space<vmem>>, %arg5: memref<1x256xf32, #tpu.memory_space<vmem>>, %arg6: memref<1x256xf32, #tpu.memory_space<vmem>>, %arg7: memref<1x1xf32, #tpu.memory_space<smem>>, %arg8: memref<1x128xf32, #tpu.memory_space<vmem>>) attributes {dimension_semantics = [#tpu.dimension_semantics<parallel>], iteration_bounds = array<i64: 1>, scalar_prefetch = 0 : i64, scratch_operands = 0 : i64, tpu.core_type = #tpu.core_type<tc>, window_params = [{transform_indices = @transform_0, window_bounds = array<i64: 128, 32>}, {pipeline_mode = #tpu.pipeline_mode<synchronous>, transform_indices = @transform_1, window_bounds = array<i64: 32, 1024>}, {pipeline_mode = #tpu.pipeline_mode<synchronous>, transform_indices = @transform_2, window_bounds = array<i64: 1, 1024>}, {pipeline_mode = #tpu.pipeline_mode<synchronous>, transform_indices = @transform_3, window_bounds = array<i64: 1024, 256>}, {pipeline_mode = #tpu.pipeline_mode<synchronous>, transform_indices = @transform_4, window_bounds = array<i64: 1, 256>}, {pipeline_mode = #tpu.pipeline_mode<synchronous>, transform_indices = @transform_5, window_bounds = array<i64: 1, 256>}, {transform_indices = @transform_6, window_bounds = array<i64: 1, 1>}, {transform_indices = @transform_7, window_bounds = array<i64: 1, 128>}]} {
    %c0 = arith.constant 0 : index
    %c0_0 = arith.constant 0 : index
    %0 = vector.load %arg1[%c0, %c0_0] : memref<128x32xf32, #tpu.memory_space<vmem>>, vector<128x32xf32>
    %1 = arith.truncf %0 : vector<128x32xf32> to vector<128x32xbf16>
    %cst = arith.constant 0.000000e+00 : f32
    %2 = vector.broadcast %cst : f32 to vector<128x256xf32>
    %c0_1 = arith.constant 0 : index
    %c0_2 = arith.constant 0 : index
    %3 = vector.load %arg2[%c0_1, %c0_2] : memref<32x1024xbf16, #tpu.memory_space<vmem>>, vector<32x256xbf16>
    %cst_3 = arith.constant dense<0.000000e+00> : vector<128x256xf32>
    %4 = tpu.matmul %1, %3, %cst_3 {dimension_numbers = #tpu.dot_dimension_numbers<[1], [0], [0], [1], [0, 0, 1, 1], [], []>} : vector<128x32xbf16>, vector<32x256xbf16>, vector<128x256xf32> -> vector<128x256xf32>
    %c0_4 = arith.constant 0 : index
    %c0_5 = arith.constant 0 : index
    %5 = vector.load %arg3[%c0_4, %c0_5] : memref<1x1024xf32, #tpu.memory_space<vmem>>, vector<1x256xf32>
    %6 = vector.broadcast %5 : vector<1x256xf32> to vector<128x256xf32>
    %7 = arith.addf %4, %6 : vector<128x256xf32>
    %cst_6 = arith.constant 0.000000e+00 : f32
    %8 = vector.broadcast %cst_6 : f32 to vector<128x256xf32>
    %9 = arith.maximumf %7, %8 : vector<128x256xf32>
    %10 = arith.truncf %9 : vector<128x256xf32> to vector<128x256xbf16>
    %c0_7 = arith.constant 0 : index
    %c0_8 = arith.constant 0 : index
    %11 = vector.load %arg4[%c0_7, %c0_8] : memref<1024x256xbf16, #tpu.memory_space<vmem>>, vector<256x256xbf16>
    %cst_9 = arith.constant dense<0.000000e+00> : vector<128x256xf32>
    %12 = tpu.matmul %10, %11, %cst_9 {dimension_numbers = #tpu.dot_dimension_numbers<[1], [0], [0], [1], [0, 0, 1, 1], [], []>} : vector<128x256xbf16>, vector<256x256xbf16>, vector<128x256xf32> -> vector<128x256xf32>
    %13 = arith.addf %2, %12 : vector<128x256xf32>
    %c0_10 = arith.constant 0 : index
    %c256 = arith.constant 256 : index
    %14 = vector.load %arg2[%c0_10, %c256] : memref<32x1024xbf16, #tpu.memory_space<vmem>>, vector<32x256xbf16>
    %cst_11 = arith.constant dense<0.000000e+00> : vector<128x256xf32>
    %15 = tpu.matmul %1, %14, %cst_11 {dimension_numbers = #tpu.dot_dimension_numbers<[1], [0], [0], [1], [0, 0, 1, 1], [], []>} : vector<128x32xbf16>, vector<32x256xbf16>, vector<128x256xf32> -> vector<128x256xf32>
    %c0_12 = arith.constant 0 : index
    %c256_13 = arith.constant 256 : index
    %16 = vector.load %arg3[%c0_12, %c256_13] : memref<1x1024xf32, #tpu.memory_space<vmem>>, vector<1x256xf32>
    %17 = vector.broadcast %16 : vector<1x256xf32> to vector<128x256xf32>
    %18 = arith.addf %15, %17 : vector<128x256xf32>
    %cst_14 = arith.constant 0.000000e+00 : f32
    %19 = vector.broadcast %cst_14 : f32 to vector<128x256xf32>
    %20 = arith.maximumf %18, %19 : vector<128x256xf32>
    %21 = arith.truncf %20 : vector<128x256xf32> to vector<128x256xbf16>
    %c256_15 = arith.constant 256 : index
    %c0_16 = arith.constant 0 : index
    %22 = vector.load %arg4[%c256_15, %c0_16] : memref<1024x256xbf16, #tpu.memory_space<vmem>>, vector<256x256xbf16>
    %cst_17 = arith.constant dense<0.000000e+00> : vector<128x256xf32>
    %23 = tpu.matmul %21, %22, %cst_17 {dimension_numbers = #tpu.dot_dimension_numbers<[1], [0], [0], [1], [0, 0, 1, 1], [], []>} : vector<128x256xbf16>, vector<256x256xbf16>, vector<128x256xf32> -> vector<128x256xf32>
    %24 = arith.addf %13, %23 : vector<128x256xf32>
    %c0_18 = arith.constant 0 : index
    %c512 = arith.constant 512 : index
    %25 = vector.load %arg2[%c0_18, %c512] : memref<32x1024xbf16, #tpu.memory_space<vmem>>, vector<32x256xbf16>
    %cst_19 = arith.constant dense<0.000000e+00> : vector<128x256xf32>
    %26 = tpu.matmul %1, %25, %cst_19 {dimension_numbers = #tpu.dot_dimension_numbers<[1], [0], [0], [1], [0, 0, 1, 1], [], []>} : vector<128x32xbf16>, vector<32x256xbf16>, vector<128x256xf32> -> vector<128x256xf32>
    %c0_20 = arith.constant 0 : index
    %c512_21 = arith.constant 512 : index
    %27 = vector.load %arg3[%c0_20, %c512_21] : memref<1x1024xf32, #tpu.memory_space<vmem>>, vector<1x256xf32>
    %28 = vector.broadcast %27 : vector<1x256xf32> to vector<128x256xf32>
    %29 = arith.addf %26, %28 : vector<128x256xf32>
    %cst_22 = arith.constant 0.000000e+00 : f32
    %30 = vector.broadcast %cst_22 : f32 to vector<128x256xf32>
    %31 = arith.maximumf %29, %30 : vector<128x256xf32>
    %32 = arith.truncf %31 : vector<128x256xf32> to vector<128x256xbf16>
    %c512_23 = arith.constant 512 : index
    %c0_24 = arith.constant 0 : index
    %33 = vector.load %arg4[%c512_23, %c0_24] : memref<1024x256xbf16, #tpu.memory_space<vmem>>, vector<256x256xbf16>
    %cst_25 = arith.constant dense<0.000000e+00> : vector<128x256xf32>
    %34 = tpu.matmul %32, %33, %cst_25 {dimension_numbers = #tpu.dot_dimension_numbers<[1], [0], [0], [1], [0, 0, 1, 1], [], []>} : vector<128x256xbf16>, vector<256x256xbf16>, vector<128x256xf32> -> vector<128x256xf32>
    %35 = arith.addf %24, %34 : vector<128x256xf32>
    %c0_26 = arith.constant 0 : index
    %c768 = arith.constant 768 : index
    %36 = vector.load %arg2[%c0_26, %c768] : memref<32x1024xbf16, #tpu.memory_space<vmem>>, vector<32x256xbf16>
    %cst_27 = arith.constant dense<0.000000e+00> : vector<128x256xf32>
    %37 = tpu.matmul %1, %36, %cst_27 {dimension_numbers = #tpu.dot_dimension_numbers<[1], [0], [0], [1], [0, 0, 1, 1], [], []>} : vector<128x32xbf16>, vector<32x256xbf16>, vector<128x256xf32> -> vector<128x256xf32>
    %c0_28 = arith.constant 0 : index
    %c768_29 = arith.constant 768 : index
    %38 = vector.load %arg3[%c0_28, %c768_29] : memref<1x1024xf32, #tpu.memory_space<vmem>>, vector<1x256xf32>
    %39 = vector.broadcast %38 : vector<1x256xf32> to vector<128x256xf32>
    %40 = arith.addf %37, %39 : vector<128x256xf32>
    %cst_30 = arith.constant 0.000000e+00 : f32
    %41 = vector.broadcast %cst_30 : f32 to vector<128x256xf32>
    %42 = arith.maximumf %40, %41 : vector<128x256xf32>
    %43 = arith.truncf %42 : vector<128x256xf32> to vector<128x256xbf16>
    %c768_31 = arith.constant 768 : index
    %c0_32 = arith.constant 0 : index
    %44 = vector.load %arg4[%c768_31, %c0_32] : memref<1024x256xbf16, #tpu.memory_space<vmem>>, vector<256x256xbf16>
    %cst_33 = arith.constant dense<0.000000e+00> : vector<128x256xf32>
    %45 = tpu.matmul %43, %44, %cst_33 {dimension_numbers = #tpu.dot_dimension_numbers<[1], [0], [0], [1], [0, 0, 1, 1], [], []>} : vector<128x256xbf16>, vector<256x256xbf16>, vector<128x256xf32> -> vector<128x256xf32>
    %46 = arith.addf %35, %45 : vector<128x256xf32>
    %c0_34 = arith.constant 0 : index
    %c0_35 = arith.constant 0 : index
    %47 = vector.load %arg5[%c0_34, %c0_35] : memref<1x256xf32, #tpu.memory_space<vmem>>, vector<1x256xf32>
    %48 = vector.broadcast %47 : vector<1x256xf32> to vector<128x256xf32>
    %49 = arith.addf %46, %48 : vector<128x256xf32>
    %cst_36 = arith.constant 0.000000e+00 : f32
    %50 = vector.broadcast %cst_36 : f32 to vector<128x256xf32>
    %51 = arith.maximumf %49, %50 : vector<128x256xf32>
    %c0_37 = arith.constant 0 : index
    %c0_38 = arith.constant 0 : index
    %52 = vector.load %arg6[%c0_37, %c0_38] : memref<1x256xf32, #tpu.memory_space<vmem>>, vector<1x256xf32>
    %53 = vector.broadcast %52 : vector<1x256xf32> to vector<128x256xf32>
    %54 = arith.mulf %51, %53 : vector<128x256xf32>
    %cst_39 = arith.constant dense<0.000000e+00> : vector<128xf32>
    %55 = vector.multi_reduction <add>, %54, %cst_39 [1] : vector<128x256xf32> to vector<128xf32>
    %56 = vector.shape_cast %55 : vector<128xf32> to vector<128x1xf32>
    %c0_40 = arith.constant 0 : index
    %c0_41 = arith.constant 0 : index
    %57 = memref.load %arg7[%c0_40, %c0_41] : memref<1x1xf32, #tpu.memory_space<smem>>
    %58 = vector.broadcast %57 : f32 to vector<128x1xf32>
    %59 = arith.addf %56, %58 : vector<128x1xf32>
    %60 = arith.negf %59 : vector<128x1xf32>
    %61 = math.exp %60 : vector<128x1xf32>
    %cst_42 = arith.constant 1.000000e+00 : f32
    %62 = vector.broadcast %cst_42 : f32 to vector<128x1xf32>
    %63 = arith.addf %62, %61 : vector<128x1xf32>
    %64 = arith.divf %62, %63 : vector<128x1xf32>
    %65 = vector.shape_cast %64 : vector<128x1xf32> to vector<1x128xf32>
    %c0_43 = arith.constant 0 : index
    %c0_44 = arith.constant 0 : index
    %66 = vector.load %arg8[%c0_43, %c0_44] : memref<1x128xf32, #tpu.memory_space<vmem>>, vector<1x128xf32>
    tpu.vector_store %arg8[%c0_43, %c0_44], %65 {strides = array<i32>} : memref<1x128xf32, #tpu.memory_space<vmem>>, vector<1x128xf32>,
    return
  }
  func.func @transform_0(%arg0: i32) -> (i32, i32) {
    %c0_i32 = arith.constant 0 : i32
    %c0_i32_0 = arith.constant 0 : i32
    return %arg0, %c0_i32 : i32, i32
  }
  func.func @transform_1(%arg0: i32) -> (i32, i32) {
    %c0_i32 = arith.constant 0 : i32
    %c0_i32_0 = arith.constant 0 : i32
    %c0_i32_1 = arith.constant 0 : i32
    return %c0_i32, %c0_i32_0 : i32, i32
  }
  func.func @transform_2(%arg0: i32) -> (i32, i32) {
    %c0_i32 = arith.constant 0 : i32
    %c0_i32_0 = arith.constant 0 : i32
    %c0_i32_1 = arith.constant 0 : i32
    return %c0_i32, %c0_i32_0 : i32, i32
  }
  func.func @transform_3(%arg0: i32) -> (i32, i32) {
    %c0_i32 = arith.constant 0 : i32
    %c0_i32_0 = arith.constant 0 : i32
    %c0_i32_1 = arith.constant 0 : i32
    return %c0_i32, %c0_i32_0 : i32, i32
  }
  func.func @transform_4(%arg0: i32) -> (i32, i32) {
    %c0_i32 = arith.constant 0 : i32
    %c0_i32_0 = arith.constant 0 : i32
    %c0_i32_1 = arith.constant 0 : i32
    return %c0_i32, %c0_i32_0 : i32, i32
  }
  func.func @transform_5(%arg0: i32) -> (i32, i32) {
    %c0_i32 = arith.constant 0 : i32
    %c0_i32_0 = arith.constant 0 : i32
    %c0_i32_1 = arith.constant 0 : i32
    return %c0_i32, %c0_i32_0 : i32, i32
  }
  func.func @transform_6(%arg0: i32) -> (i32, i32) {
    %c0_i32 = arith.constant 0 : i32
    %c0_i32_0 = arith.constant 0 : i32
    %c0_i32_1 = arith.constant 0 : i32
    return %c0_i32, %c0_i32_0 : i32, i32
  }
  func.func @transform_7(%arg0: i32) -> (i32, i32) {
    %c0_i32 = arith.constant 0 : i32
    %c0_i32_0 = arith.constant 0 : i32
    return %arg0, %c0_i32 : i32, i32
  }
}

</mosaic_0001>

<llo_original>
// kernel: discrimentor_forward.1
$region0: #{discrimentor_forward.1}
  #allocation0 [shape = 'u32[]', space=smem, size = 0x4, offset = 0x4, fixed_abs, tag = 'smem constant byte address 0x4 - core index']
  #allocation1 [shape = 'u32[144,128]{1,0:T(1,128)}', space=vmem, size = 0x12000, scoped, tag = 'internal scratch']
  #allocation2 [shape = 'f32[1,1]{1,0:T(1,128)S(6)}', space=smem, size = 0x200, scoped, tag = 'scoped memory for discrimentor_forward.1']
  %s0 = inlined_call_operand.vmem [shape: f32[128,32], index: 0, kind: input, shape index: {}]
  %s1 = inlined_call_operand.vmem [shape: bf16[32,1024], index: 1, kind: input, shape index: {}]
  %s2 = inlined_call_operand.vmem [shape: f32[1,1024], index: 2, kind: input, shape index: {}]
  %s3 = inlined_call_operand.vmem [shape: bf16[1024,256], index: 3, kind: input, shape index: {}]
  %s4 = inlined_call_operand.vmem [shape: f32[1,256], index: 4, kind: input, shape index: {}]
  %s5 = inlined_call_operand.vmem [shape: f32[1,256], index: 5, kind: input, shape index: {}]
  %s6 = inlined_call_operand.<no memory space> [shape: f32[1,1], index: 6, kind: input, shape index: {}]
  %s7 = inlined_call_operand.vmem [shape: f32[1,128], index: 7, kind: output, shape index: {}]
  %s8 = sld [smem:[#allocation0]]
  $region38: #{discrimentor_forward.1} parent=0
    _
  %s10 = ssub.s32 1, %s8
  %s11 = scalar_select 0, %s10, %s8
  %12 = sst [smem:[#allocation2]] %s6
  // Predicated region
  $region2: #{discrimentor_forward.1} parent=0 // pred_check
    _
  $region3: #{discrimentor_forward.1} parent=0 // pred_check_branch
    %14 = sbr.rel (0) target = $region5
  $region4: #{discrimentor_forward.1} parent=0 // pred_region
    _
  $region5: #{discrimentor_forward.1} parent=0 // pred_fallthru
    _
  // Predicated region
  $region6: #{discrimentor_forward.1} parent=0 // pred_check
    _
  $region7: #{discrimentor_forward.1} parent=0 // pred_check_branch
    %16 = sbr.rel (0) target = $region9
  $region8: #{discrimentor_forward.1} parent=0 // pred_region
    _
  $region9: #{discrimentor_forward.1} parent=0 // pred_fallthru
    _
  // Predicated region
  $region10: #{discrimentor_forward.1} parent=0 // pred_check
    _
  $region11: #{discrimentor_forward.1} parent=0 // pred_check_branch
    %18 = sbr.rel (0) target = $region13
  $region12: #{discrimentor_forward.1} parent=0 // pred_region
    _
  $region13: #{discrimentor_forward.1} parent=0 // pred_fallthru
    _
  // Predicated region
  $region14: #{discrimentor_forward.1} parent=0 // pred_check
    _
  $region15: #{discrimentor_forward.1} parent=0 // pred_check_branch
    %20 = sbr.rel (0) target = $region17
  $region16: #{discrimentor_forward.1} parent=0 // pred_region
    _
  $region17: #{discrimentor_forward.1} parent=0 // pred_fallthru
    _
  // Predicated region
  $region18: #{discrimentor_forward.1} parent=0 // pred_check
    _
  $region19: #{discrimentor_forward.1} parent=0 // pred_check_branch
    %22 = sbr.rel (0) target = $region21
  $region20: #{discrimentor_forward.1} parent=0 // pred_region
    _
  $region21: #{discrimentor_forward.1} parent=0 // pred_fallthru
    _
  // Predicated region
  $region22: #{discrimentor_forward.1} parent=0 // pred_check
    _
  $region23: #{discrimentor_forward.1} parent=0 // pred_check_branch
    %24 = sbr.rel (0) target = $region25
  $region24: #{discrimentor_forward.1} parent=0 // pred_region
    _
  $region25: #{discrimentor_forward.1} parent=0 // pred_fallthru
    _
  // Predicated region
  $region26: #{discrimentor_forward.1} parent=0 // pred_check
    _
  $region27: #{discrimentor_forward.1} parent=0 // pred_check_branch
    %26 = sbr.rel (0) target = $region29
  $region28: #{discrimentor_forward.1} parent=0 // pred_region
    _
  $region29: #{discrimentor_forward.1} parent=0 // pred_fallthru
    _
  %v28 = vld [vmem:[%s0] sm:$0xff]
  %v29 = vld [vmem:[%s0 + $0x8] sm:$0xff]
  %v30 = vld [vmem:[%s0 + $0x10] sm:$0xff]
  %v31 = vld [vmem:[%s0 + $0x18] sm:$0xff]
  %v32 = vld [vmem:[%s0 + $0x20] sm:$0xff]
  %v33 = vld [vmem:[%s0 + $0x28] sm:$0xff]
  %v34 = vld [vmem:[%s0 + $0x30] sm:$0xff]
  %v35 = vld [vmem:[%s0 + $0x38] sm:$0xff]
  %v36 = vld [vmem:[%s0 + $0x40] sm:$0xff]
  %v37 = vld [vmem:[%s0 + $0x48] sm:$0xff]
  %v38 = vld [vmem:[%s0 + $0x50] sm:$0xff]
  %v39 = vld [vmem:[%s0 + $0x58] sm:$0xff]
  %v40 = vld [vmem:[%s0 + $0x60] sm:$0xff]
  %v41 = vld [vmem:[%s0 + $0x68] sm:$0xff]
  %v42 = vld [vmem:[%s0 + $0x70] sm:$0xff]
  %v43 = vld [vmem:[%s0 + $0x78] sm:$0xff]
  %v44 = vpack.c.bf16 %v29, %v28
  %v45 = vpack.c.bf16 %v31, %v30
  %v46 = vpack.c.bf16 %v33, %v32
  %v47 = vpack.c.bf16 %v35, %v34
  %v48 = vpack.c.bf16 %v37, %v36
  %v49 = vpack.c.bf16 %v39, %v38
  %v50 = vpack.c.bf16 %v41, %v40
  %v51 = vpack.c.bf16 %v43, %v42
  %v52 = vld [vmem:[%s1] sm:$0xff]
  %v53 = vld [vmem:[%s1 + $0x20] sm:$0xff]
  %v54 = vld [vmem:[%s1 + $0x40] sm:$0xff]
  %v55 = vld [vmem:[%s1 + $0x60] sm:$0xff]
  %v56 = vld [vmem:[%s2] sm:$0x3]
  %v58 = vlaneseq
  %v59 = vshrl.u32 %v58, 7
  %v60 = vsub.s32 0, %v59
  %v61 = vrot.slane %v56, %v60
  %v62 = vlaneseq
  %v63 = vshrl.u32 %v62, 7
  %v64 = vsub.s32 1, %v63
  %v65 = vrot.slane %v56, %v64
  %v72 = vunpack.c.l.b16 %v52
  %v73 = vunpack.c.h.b16 %v52
  %v74 = vunpack.c.l.b16 %v53
  %v75 = vunpack.c.h.b16 %v53
  %v76 = vunpack.c.l.b16 %v54
  %v77 = vunpack.c.h.b16 %v54
  %v78 = vunpack.c.l.b16 %v55
  %v79 = vunpack.c.h.b16 %v55
  %v80 = vpack.c.b16 %v74, %v72
  %v81 = vpack.c.b16 %v75, %v73
  %v82 = vpack.c.b16 %v78, %v76
  %v83 = vpack.c.b16 %v79, %v77
  %vm88 = vcmask 261120
  %v90 = vsel %vm88, %v44, 0
  %v93 = vsel %vm88, %v45, 0
  %v96 = vsel %vm88, %v46, 0
  %v99 = vsel %vm88, %v47, 0
  %v102 = vsel %vm88, %v48, 0
  %v105 = vsel %vm88, %v49, 0
  %v108 = vsel %vm88, %v50, 0
  %v111 = vsel %vm88, %v51, 0
  %113 = vmatprep.subr.bf16.mxu0 0
  %114 = vmatpush1.bf16.msra.mxu0 0
  %115 = vmatprep.subr.bf16.mxu0 0
  %116 = vmatpush1.bf16.msra.mxu0 0
  %117 = vmatprep.subr.bf16.mxu0 0
  %118 = vmatpush1.bf16.msra.mxu0 0
  %119 = vmatprep.subr.bf16.mxu0 0
  %120 = vmatpush1.bf16.msra.mxu0 0
  %121 = vmatprep.subr.bf16.mxu0 0
  %122 = vmatpush1.bf16.msra.mxu0 0
  %123 = vmatprep.subr.bf16.mxu0 0
  %124 = vmatpush1.bf16.msra.mxu0 0
  %125 = vmatprep.subr.bf16.mxu0 %v83
  %126 = vmatpush1.bf16.msra.mxu0 %v82
  %127 = vmatprep.subr.bf16.mxu0 %v81
  %128 = vmatpush1.bf16.msra.mxu0 %v80
  %129 = vmatprep.subr.bf16.mxu0 0
  %130 = vmatpush2.bf16.msra.mxu0 0
  %131 = vmatprep.subr.bf16.mxu0 0
  %132 = vmatpush2.bf16.msra.mxu0 0
  %133 = vmatprep.subr.bf16.mxu0 0
  %134 = vmatpush2.bf16.msra.mxu0 0
  %135 = vmatprep.subr.bf16.mxu0 0
  %136 = vmatpush2.bf16.msra.mxu0 0
  %137 = vmatprep.subr.bf16.mxu0 0
  %138 = vmatpush2.bf16.msra.mxu0 0
  %139 = vmatprep.subr.bf16.mxu0 0
  %140 = vmatpush2.bf16.msra.mxu0 0
  %141 = vmatprep.subr.bf16.mxu0 0
  %142 = vmatpush2.bf16.msra.mxu0 0
  %143 = vmatprep.subr.bf16.mxu0 0
  %144 = vmatpush2.bf16.msra.mxu0 0
  %145 = vmatprep.mubr.bf16.mxu0 0
  %146 = vmatmul.mubr.bf16.gmra.mxu0 %v90
  %v147 = vpop.f32.mrf.mxu0
  %v148 = vadd.f32 %v61, %v147
  %v149 = vpop.f32.mrf.mxu0
  %v150 = vadd.f32 %v65, %v149
  %v151 = vpop.f32.mrf.mxu0
  %v152 = vadd.f32 %v61, %v151
  %v153 = vpop.f32.mrf.mxu0
  %v154 = vadd.f32 %v65, %v153
  %155 = vmatprep.mubr.bf16.mxu0 0
  %156 = vmatmul.mubr.bf16.gmra.mxu0 %v93
  %v157 = vpop.f32.mrf.mxu0
  %v158 = vadd.f32 %v61, %v157
  %v159 = vpop.f32.mrf.mxu0
  %v160 = vadd.f32 %v65, %v159
  %v161 = vpop.f32.mrf.mxu0
  %v162 = vadd.f32 %v61, %v161
  %v163 = vpop.f32.mrf.mxu0
  %v164 = vadd.f32 %v65, %v163
  %165 = vmatprep.mubr.bf16.mxu0 0
  %166 = vmatmul.mubr.bf16.gmra.mxu0 %v96
  %v167 = vpop.f32.mrf.mxu0
  %v168 = vadd.f32 %v61, %v167
  %v169 = vpop.f32.mrf.mxu0
  %v170 = vadd.f32 %v65, %v169
  %v171 = vpop.f32.mrf.mxu0
  %v172 = vadd.f32 %v61, %v171
  %v173 = vpop.f32.mrf.mxu0
  %v174 = vadd.f32 %v65, %v173
  %175 = vmatprep.mubr.bf16.mxu0 0
  %176 = vmatmul.mubr.bf16.gmra.mxu0 %v99
  %v177 = vpop.f32.mrf.mxu0
  %v178 = vadd.f32 %v61, %v177
  %v179 = vpop.f32.mrf.mxu0
  %v180 = vadd.f32 %v65, %v179
  %v181 = vpop.f32.mrf.mxu0
  %v182 = vadd.f32 %v61, %v181
  %v183 = vpop.f32.mrf.mxu0
  %v184 = vadd.f32 %v65, %v183
  %185 = vmatprep.mubr.bf16.mxu0 0
  %186 = vmatmul.mubr.bf16.gmra.mxu0 %v102
  %v187 = vpop.f32.mrf.mxu0
  %v188 = vadd.f32 %v61, %v187
  %v189 = vpop.f32.mrf.mxu0
  %v190 = vadd.f32 %v65, %v189
  %v191 = vpop.f32.mrf.mxu0
  %v192 = vadd.f32 %v61, %v191
  %v193 = vpop.f32.mrf.mxu0
  %v194 = vadd.f32 %v65, %v193
  %195 = vmatprep.mubr.bf16.mxu0 0
  %196 = vmatmul.mubr.bf16.gmra.mxu0 %v105
  %v197 = vpop.f32.mrf.mxu0
  %v198 = vadd.f32 %v61, %v197
  %v199 = vpop.f32.mrf.mxu0
  %v200 = vadd.f32 %v65, %v199
  %v201 = vpop.f32.mrf.mxu0
  %v202 = vadd.f32 %v61, %v201
  %v203 = vpop.f32.mrf.mxu0
  %v204 = vadd.f32 %v65, %v203
  %205 = vmatprep.mubr.bf16.mxu0 0
  %206 = vmatmul.mubr.bf16.gmra.mxu0 %v108
  %v207 = vpop.f32.mrf.mxu0
  %v208 = vadd.f32 %v61, %v207
  %v209 = vpop.f32.mrf.mxu0
  %v210 = vadd.f32 %v65, %v209
  %v211 = vpop.f32.mrf.mxu0
  %v212 = vadd.f32 %v61, %v211
  %v213 = vpop.f32.mrf.mxu0
  %v214 = vadd.f32 %v65, %v213
  %215 = vmatprep.mubr.bf16.mxu0 0
  %216 = vmatmul.mubr.bf16.gmra.mxu0 %v111
  %v217 = vpop.f32.mrf.mxu0
  %v218 = vadd.f32 %v61, %v217
  %v219 = vpop.f32.mrf.mxu0
  %v220 = vadd.f32 %v65, %v219
  %v221 = vpop.f32.mrf.mxu0
  %v222 = vadd.f32 %v61, %v221
  %v223 = vpop.f32.mrf.mxu0
  %v224 = vadd.f32 %v65, %v223
  %225 = vdwg.mxu0
  %v226 = vmax.f32 %v148, 0.0
  %v227 = vmax.f32 %v150, 0.0
  %v228 = vmax.f32 %v152, 0.0
  %v229 = vmax.f32 %v154, 0.0
  %v230 = vmax.f32 %v158, 0.0
  %v231 = vmax.f32 %v160, 0.0
  %v232 = vmax.f32 %v162, 0.0
  %v233 = vmax.f32 %v164, 0.0
  %v234 = vmax.f32 %v168, 0.0
  %v235 = vmax.f32 %v170, 0.0
  %v236 = vmax.f32 %v172, 0.0
  %v237 = vmax.f32 %v174, 0.0
  %v238 = vmax.f32 %v178, 0.0
  %v239 = vmax.f32 %v180, 0.0
  %v240 = vmax.f32 %v182, 0.0
  %v241 = vmax.f32 %v184, 0.0
  %v242 = vmax.f32 %v188, 0.0
  %v243 = vmax.f32 %v190, 0.0
  %v244 = vmax.f32 %v192, 0.0
  %v245 = vmax.f32 %v194, 0.0
  %v246 = vmax.f32 %v198, 0.0
  %v247 = vmax.f32 %v200, 0.0
  %v248 = vmax.f32 %v202, 0.0
  %v249 = vmax.f32 %v204, 0.0
  %v250 = vmax.f32 %v208, 0.0
  %v251 = vmax.f32 %v210, 0.0
  %v252 = vmax.f32 %v212, 0.0
  %v253 = vmax.f32 %v214, 0.0
  %v254 = vmax.f32 %v218, 0.0
  %v255 = vmax.f32 %v220, 0.0
  %v256 = vmax.f32 %v222, 0.0
  %v257 = vmax.f32 %v224, 0.0
  %v258 = vpack.c.bf16 %v228, %v226
  %v259 = vpack.c.bf16 %v229, %v227
  %v260 = vpack.c.bf16 %v232, %v230
  %v261 = vpack.c.bf16 %v233, %v231
  %v262 = vpack.c.bf16 %v236, %v234
  %v263 = vpack.c.bf16 %v237, %v235
  %v264 = vpack.c.bf16 %v240, %v238
  %v265 = vpack.c.bf16 %v241, %v239
  %v266 = vpack.c.bf16 %v244, %v242
  %v267 = vpack.c.bf16 %v245, %v243
  %v268 = vpack.c.bf16 %v248, %v246
  %v269 = vpack.c.bf16 %v249, %v247
  %v270 = vpack.c.bf16 %v252, %v250
  %v271 = vpack.c.bf16 %v253, %v251
  %v272 = vpack.c.bf16 %v256, %v254
  %v273 = vpack.c.bf16 %v257, %v255
  %v274 = vld [vmem:[%s3] sm:$0xff]
  %v275 = vld [vmem:[%s3 + $0x8] sm:$0xff]
  %v276 = vld [vmem:[%s3 + $0x10] sm:$0xff]
  %v277 = vld [vmem:[%s3 + $0x18] sm:$0xff]
  %v278 = vld [vmem:[%s3 + $0x20] sm:$0xff]
  %v279 = vld [vmem:[%s3 + $0x28] sm:$0xff]
  %v280 = vld [vmem:[%s3 + $0x30] sm:$0xff]
  %v281 = vld [vmem:[%s3 + $0x38] sm:$0xff]
  %v282 = vld [vmem:[%s3 + $0x40] sm:$0xff]
  %v283 = vld [vmem:[%s3 + $0x48] sm:$0xff]
  %v284 = vld [vmem:[%s3 + $0x50] sm:$0xff]
  %v285 = vld [vmem:[%s3 + $0x58] sm:$0xff]
  %v286 = vld [vmem:[%s3 + $0x60] sm:$0xff]
  %v287 = vld [vmem:[%s3 + $0x68] sm:$0xff]
  %v288 = vld [vmem:[%s3 + $0x70] sm:$0xff]
  %v289 = vld [vmem:[%s3 + $0x78] sm:$0xff]
  %v290 = vld [vmem:[%s3 + $0x80] sm:$0xff]
  %v291 = vld [vmem:[%s3 + $0x88] sm:$0xff]
  %v292 = vld [vmem:[%s3 + $0x90] sm:$0xff]
  %v293 = vld [vmem:[%s3 + $0x98] sm:$0xff]
  %v294 = vld [vmem:[%s3 + $0xa0] sm:$0xff]
  %v295 = vld [vmem:[%s3 + $0xa8] sm:$0xff]
  %v296 = vld [vmem:[%s3 + $0xb0] sm:$0xff]
  %v297 = vld [vmem:[%s3 + $0xb8] sm:$0xff]
  %v298 = vld [vmem:[%s3 + $0xc0] sm:$0xff]
  %v299 = vld [vmem:[%s3 + $0xc8] sm:$0xff]
  %v300 = vld [vmem:[%s3 + $0xd0] sm:$0xff]
  %v301 = vld [vmem:[%s3 + $0xd8] sm:$0xff]
  %v302 = vld [vmem:[%s3 + $0xe0] sm:$0xff]
  %v303 = vld [vmem:[%s3 + $0xe8] sm:$0xff]
  %v304 = vld [vmem:[%s3 + $0xf0] sm:$0xff]
  %v305 = vld [vmem:[%s3 + $0xf8] sm:$0xff]
  %v306 = vld [vmem:[%s1 + $0x8] sm:$0xff]
  %v307 = vld [vmem:[%s1 + $0x28] sm:$0xff]
  %v308 = vld [vmem:[%s1 + $0x48] sm:$0xff]
  %v309 = vld [vmem:[%s1 + $0x68] sm:$0xff]
  %v310 = vld [vmem:[%s2 + $0x2] sm:$0x3]
  %v312 = vlaneseq
  %v313 = vshrl.u32 %v312, 7
  %v314 = vsub.s32 0, %v313
  %v315 = vrot.slane %v310, %v314
  %v316 = vlaneseq
  %v317 = vshrl.u32 %v316, 7
  %v318 = vsub.s32 1, %v317
  %v319 = vrot.slane %v310, %v318
  %v326 = vunpack.c.l.b16 %v306
  %v327 = vunpack.c.h.b16 %v306
  %v328 = vunpack.c.l.b16 %v307
  %v329 = vunpack.c.h.b16 %v307
  %v330 = vunpack.c.l.b16 %v308
  %v331 = vunpack.c.h.b16 %v308
  %v332 = vunpack.c.l.b16 %v309
  %v333 = vunpack.c.h.b16 %v309
  %v334 = vpack.c.b16 %v328, %v326
  %v335 = vpack.c.b16 %v329, %v327
  %v336 = vpack.c.b16 %v332, %v330
  %v337 = vpack.c.b16 %v333, %v331
  %342 = vmatprep.subr.bf16.mxu0 0
  %343 = vmatpush1.bf16.msra.mxu0 0
  %344 = vmatprep.subr.bf16.mxu0 0
  %345 = vmatpush1.bf16.msra.mxu0 0
  %346 = vmatprep.subr.bf16.mxu0 0
  %347 = vmatpush1.bf16.msra.mxu0 0
  %348 = vmatprep.subr.bf16.mxu0 0
  %349 = vmatpush1.bf16.msra.mxu0 0
  %350 = vmatprep.subr.bf16.mxu0 0
  %351 = vmatpush1.bf16.msra.mxu0 0
  %352 = vmatprep.subr.bf16.mxu0 0
  %353 = vmatpush1.bf16.msra.mxu0 0
  %354 = vmatprep.subr.bf16.mxu0 %v337
  %355 = vmatpush1.bf16.msra.mxu0 %v336
  %356 = vmatprep.subr.bf16.mxu0 %v335
  %357 = vmatpush1.bf16.msra.mxu0 %v334
  %358 = vmatprep.subr.bf16.mxu0 0
  %359 = vmatpush2.bf16.msra.mxu0 0
  %360 = vmatprep.subr.bf16.mxu0 0
  %361 = vmatpush2.bf16.msra.mxu0 0
  %362 = vmatprep.subr.bf16.mxu0 0
  %363 = vmatpush2.bf16.msra.mxu0 0
  %364 = vmatprep.subr.bf16.mxu0 0
  %365 = vmatpush2.bf16.msra.mxu0 0
  %366 = vmatprep.subr.bf16.mxu0 0
  %367 = vmatpush2.bf16.msra.mxu0 0
  %368 = vmatprep.subr.bf16.mxu0 0
  %369 = vmatpush2.bf16.msra.mxu0 0
  %370 = vmatprep.subr.bf16.mxu0 0
  %371 = vmatpush2.bf16.msra.mxu0 0
  %372 = vmatprep.subr.bf16.mxu0 0
  %373 = vmatpush2.bf16.msra.mxu0 0
  %374 = vmatprep.mubr.bf16.mxu0 0
  %375 = vmatmul.mubr.bf16.gmra.mxu0 %v90
  %v376 = vpop.f32.mrf.mxu0
  %v377 = vadd.f32 %v315, %v376
  %v378 = vpop.f32.mrf.mxu0
  %v379 = vadd.f32 %v319, %v378
  %v380 = vpop.f32.mrf.mxu0
  %v381 = vadd.f32 %v315, %v380
  %v382 = vpop.f32.mrf.mxu0
  %v383 = vadd.f32 %v319, %v382
  %384 = vmatprep.mubr.bf16.mxu0 0
  %385 = vmatmul.mubr.bf16.gmra.mxu0 %v93
  %v386 = vpop.f32.mrf.mxu0
  %v387 = vadd.f32 %v315, %v386
  %v388 = vpop.f32.mrf.mxu0
  %v389 = vadd.f32 %v319, %v388
  %v390 = vpop.f32.mrf.mxu0
  %v391 = vadd.f32 %v315, %v390
  %v392 = vpop.f32.mrf.mxu0
  %v393 = vadd.f32 %v319, %v392
  %394 = vmatprep.mubr.bf16.mxu0 0
  %395 = vmatmul.mubr.bf16.gmra.mxu0 %v96
  %v396 = vpop.f32.mrf.mxu0
  %v397 = vadd.f32 %v315, %v396
  %v398 = vpop.f32.mrf.mxu0
  %v399 = vadd.f32 %v319, %v398
  %v400 = vpop.f32.mrf.mxu0
  %v401 = vadd.f32 %v315, %v400
  %v402 = vpop.f32.mrf.mxu0
  %v403 = vadd.f32 %v319, %v402
  %404 = vmatprep.mubr.bf16.mxu0 0
  %405 = vmatmul.mubr.bf16.gmra.mxu0 %v99
  %v406 = vpop.f32.mrf.mxu0
  %v407 = vadd.f32 %v315, %v406
  %v408 = vpop.f32.mrf.mxu0
  %v409 = vadd.f32 %v319, %v408
  %v410 = vpop.f32.mrf.mxu0
  %v411 = vadd.f32 %v315, %v410
  %v412 = vpop.f32.mrf.mxu0
  %v413 = vadd.f32 %v319, %v412
  %414 = vmatprep.mubr.bf16.mxu0 0
  %415 = vmatmul.mubr.bf16.gmra.mxu0 %v102
  %v416 = vpop.f32.mrf.mxu0
  %v417 = vadd.f32 %v315, %v416
  %v418 = vpop.f32.mrf.mxu0
  %v419 = vadd.f32 %v319, %v418
  %v420 = vpop.f32.mrf.mxu0
  %v421 = vadd.f32 %v315, %v420
  %v422 = vpop.f32.mrf.mxu0
  %v423 = vadd.f32 %v319, %v422
  %424 = vmatprep.mubr.bf16.mxu0 0
  %425 = vmatmul.mubr.bf16.gmra.mxu0 %v105
  %v426 = vpop.f32.mrf.mxu0
  %v427 = vadd.f32 %v315, %v426
  %v428 = vpop.f32.mrf.mxu0
  %v429 = vadd.f32 %v319, %v428
  %v430 = vpop.f32.mrf.mxu0
  %v431 = vadd.f32 %v315, %v430
  %v432 = vpop.f32.mrf.mxu0
  %v433 = vadd.f32 %v319, %v432
  %434 = vmatprep.mubr.bf16.mxu0 0
  %435 = vmatmul.mubr.bf16.gmra.mxu0 %v108
  %v436 = vpop.f32.mrf.mxu0
  %v437 = vadd.f32 %v315, %v436
  %v438 = vpop.f32.mrf.mxu0
  %v439 = vadd.f32 %v319, %v438
  %v440 = vpop.f32.mrf.mxu0
  %v441 = vadd.f32 %v315, %v440
  %v442 = vpop.f32.mrf.mxu0
  %v443 = vadd.f32 %v319, %v442
  %444 = vmatprep.mubr.bf16.mxu0 0
  %445 = vmatmul.mubr.bf16.gmra.mxu0 %v111
  %v446 = vpop.f32.mrf.mxu0
  %v447 = vadd.f32 %v315, %v446
  %v448 = vpop.f32.mrf.mxu0
  %v449 = vadd.f32 %v319, %v448
  %v450 = vpop.f32.mrf.mxu0
  %v451 = vadd.f32 %v315, %v450
  %v452 = vpop.f32.mrf.mxu0
  %v453 = vadd.f32 %v319, %v452
  %454 = vdwg.mxu0
  %v455 = vmax.f32 %v377, 0.0
  %v456 = vmax.f32 %v379, 0.0
  %v457 = vmax.f32 %v381, 0.0
  %v458 = vmax.f32 %v383, 0.0
  %v459 = vmax.f32 %v387, 0.0
  %v460 = vmax.f32 %v389, 0.0
  %v461 = vmax.f32 %v391, 0.0
  %v462 = vmax.f32 %v393, 0.0
  %v463 = vmax.f32 %v397, 0.0
  %v464 = vmax.f32 %v399, 0.0
  %v465 = vmax.f32 %v401, 0.0
  %v466 = vmax.f32 %v403, 0.0
  %v467 = vmax.f32 %v407, 0.0
  %v468 = vmax.f32 %v409, 0.0
  %v469 = vmax.f32 %v411, 0.0
  %v470 = vmax.f32 %v413, 0.0
  %v471 = vmax.f32 %v417, 0.0
  %v472 = vmax.f32 %v419, 0.0
  %v473 = vmax.f32 %v421, 0.0
  %v474 = vmax.f32 %v423, 0.0
  %v475 = vmax.f32 %v427, 0.0
  %v476 = vmax.f32 %v429, 0.0
  %v477 = vmax.f32 %v431, 0.0
  %v478 = vmax.f32 %v433, 0.0
  %v479 = vmax.f32 %v437, 0.0
  %v480 = vmax.f32 %v439, 0.0
  %v481 = vmax.f32 %v441, 0.0
  %v482 = vmax.f32 %v443, 0.0
  %v483 = vmax.f32 %v447, 0.0
  %v484 = vmax.f32 %v449, 0.0
  %v485 = vmax.f32 %v451, 0.0
  %v486 = vmax.f32 %v453, 0.0
  %v487 = vpack.c.bf16 %v457, %v455
  %v488 = vpack.c.bf16 %v458, %v456
  %v489 = vpack.c.bf16 %v461, %v459
  %v490 = vpack.c.bf16 %v462, %v460
  %v491 = vpack.c.bf16 %v465, %v463
  %v492 = vpack.c.bf16 %v466, %v464
  %v493 = vpack.c.bf16 %v469, %v467
  %v494 = vpack.c.bf16 %v470, %v468
  %v495 = vpack.c.bf16 %v473, %v471
  %v496 = vpack.c.bf16 %v474, %v472
  %v497 = vpack.c.bf16 %v477, %v475
  %v498 = vpack.c.bf16 %v478, %v476
  %v499 = vpack.c.bf16 %v481, %v479
  %v500 = vpack.c.bf16 %v482, %v480
  %v501 = vpack.c.bf16 %v485, %v483
  %v502 = vpack.c.bf16 %v486, %v484
  %v503 = vld [vmem:[%s3 + $0x100] sm:$0xff]
  %v504 = vld [vmem:[%s3 + $0x108] sm:$0xff]
  %v505 = vld [vmem:[%s3 + $0x110] sm:$0xff]
  %v506 = vld [vmem:[%s3 + $0x118] sm:$0xff]
  %v507 = vld [vmem:[%s3 + $0x120] sm:$0xff]
  %v508 = vld [vmem:[%s3 + $0x128] sm:$0xff]
  %v509 = vld [vmem:[%s3 + $0x130] sm:$0xff]
  %v510 = vld [vmem:[%s3 + $0x138] sm:$0xff]
  %v511 = vld [vmem:[%s3 + $0x140] sm:$0xff]
  %v512 = vld [vmem:[%s3 + $0x148] sm:$0xff]
  %v513 = vld [vmem:[%s3 + $0x150] sm:$0xff]
  %v514 = vld [vmem:[%s3 + $0x158] sm:$0xff]
  %v515 = vld [vmem:[%s3 + $0x160] sm:$0xff]
  %v516 = vld [vmem:[%s3 + $0x168] sm:$0xff]
  %v517 = vld [vmem:[%s3 + $0x170] sm:$0xff]
  %v518 = vld [vmem:[%s3 + $0x178] sm:$0xff]
  %v519 = vld [vmem:[%s3 + $0x180] sm:$0xff]
  %v520 = vld [vmem:[%s3 + $0x188] sm:$0xff]
  %v521 = vld [vmem:[%s3 + $0x190] sm:$0xff]
  %v522 = vld [vmem:[%s3 + $0x198] sm:$0xff]
  %v523 = vld [vmem:[%s3 + $0x1a0] sm:$0xff]
  %v524 = vld [vmem:[%s3 + $0x1a8] sm:$0xff]
  %v525 = vld [vmem:[%s3 + $0x1b0] sm:$0xff]
  %v526 = vld [vmem:[%s3 + $0x1b8] sm:$0xff]
  %v527 = vld [vmem:[%s3 + $0x1c0] sm:$0xff]
  %v528 = vld [vmem:[%s3 + $0x1c8] sm:$0xff]
  %v529 = vld [vmem:[%s3 + $0x1d0] sm:$0xff]
  %v530 = vld [vmem:[%s3 + $0x1d8] sm:$0xff]
  %v531 = vld [vmem:[%s3 + $0x1e0] sm:$0xff]
  %v532 = vld [vmem:[%s3 + $0x1e8] sm:$0xff]
  %v533 = vld [vmem:[%s3 + $0x1f0] sm:$0xff]
  %v534 = vld [vmem:[%s3 + $0x1f8] sm:$0xff]
  %v567 = vunpack.c.l.b16 %v503
  %v568 = vunpack.c.h.b16 %v503
  %v569 = vunpack.c.l.b16 %v504
  %v570 = vunpack.c.h.b16 %v504
  %v571 = vunpack.c.l.b16 %v505
  %v572 = vunpack.c.h.b16 %v505
  %v573 = vunpack.c.l.b16 %v506
  %v574 = vunpack.c.h.b16 %v506
  %v575 = vunpack.c.l.b16 %v507
  %v576 = vunpack.c.h.b16 %v507
  %v577 = vunpack.c.l.b16 %v508
  %v578 = vunpack.c.h.b16 %v508
  %v579 = vunpack.c.l.b16 %v509
  %v580 = vunpack.c.h.b16 %v509
  %v581 = vunpack.c.l.b16 %v510
  %v582 = vunpack.c.h.b16 %v510
  %v583 = vunpack.c.l.b16 %v511
  %v584 = vunpack.c.h.b16 %v511
  %v585 = vunpack.c.l.b16 %v512
  %v586 = vunpack.c.h.b16 %v512
  %v587 = vunpack.c.l.b16 %v513
  %v588 = vunpack.c.h.b16 %v513
  %v589 = vunpack.c.l.b16 %v514
  %v590 = vunpack.c.h.b16 %v514
  %v591 = vunpack.c.l.b16 %v515
  %v592 = vunpack.c.h.b16 %v515
  %v593 = vunpack.c.l.b16 %v516
  %v594 = vunpack.c.h.b16 %v516
  %v595 = vunpack.c.l.b16 %v517
  %v596 = vunpack.c.h.b16 %v517
  %v597 = vunpack.c.l.b16 %v518
  %v598 = vunpack.c.h.b16 %v518
  %v599 = vunpack.c.l.b16 %v519
  %v600 = vunpack.c.h.b16 %v519
  %v601 = vunpack.c.l.b16 %v520
  %v602 = vunpack.c.h.b16 %v520
  %v603 = vunpack.c.l.b16 %v521
  %v604 = vunpack.c.h.b16 %v521
  %v605 = vunpack.c.l.b16 %v522
  %v606 = vunpack.c.h.b16 %v522
  %v607 = vunpack.c.l.b16 %v523
  %v608 = vunpack.c.h.b16 %v523
  %v609 = vunpack.c.l.b16 %v524
  %v610 = vunpack.c.h.b16 %v524
  %v611 = vunpack.c.l.b16 %v525
  %v612 = vunpack.c.h.b16 %v525
  %v613 = vunpack.c.l.b16 %v526
  %v614 = vunpack.c.h.b16 %v526
  %v615 = vunpack.c.l.b16 %v527
  %v616 = vunpack.c.h.b16 %v527
  %v617 = vunpack.c.l.b16 %v528
  %v618 = vunpack.c.h.b16 %v528
  %v619 = vunpack.c.l.b16 %v529
  %v620 = vunpack.c.h.b16 %v529
  %v621 = vunpack.c.l.b16 %v530
  %v622 = vunpack.c.h.b16 %v530
  %v623 = vunpack.c.l.b16 %v531
  %v624 = vunpack.c.h.b16 %v531
  %v625 = vunpack.c.l.b16 %v532
  %v626 = vunpack.c.h.b16 %v532
  %v627 = vunpack.c.l.b16 %v533
  %v628 = vunpack.c.h.b16 %v533
  %v629 = vunpack.c.l.b16 %v534
  %v630 = vunpack.c.h.b16 %v534
  %v631 = vpack.c.b16 %v569, %v567
  %v632 = vpack.c.b16 %v570, %v568
  %v633 = vpack.c.b16 %v573, %v571
  %v634 = vpack.c.b16 %v574, %v572
  %v635 = vpack.c.b16 %v577, %v575
  %v636 = vpack.c.b16 %v578, %v576
  %v637 = vpack.c.b16 %v581, %v579
  %v638 = vpack.c.b16 %v582, %v580
  %v639 = vpack.c.b16 %v585, %v583
  %v640 = vpack.c.b16 %v586, %v584
  %v641 = vpack.c.b16 %v589, %v587
  %v642 = vpack.c.b16 %v590, %v588
  %v643 = vpack.c.b16 %v593, %v591
  %v644 = vpack.c.b16 %v594, %v592
  %v645 = vpack.c.b16 %v597, %v595
  %v646 = vpack.c.b16 %v598, %v596
  %v647 = vpack.c.b16 %v601, %v599
  %v648 = vpack.c.b16 %v602, %v600
  %v649 = vpack.c.b16 %v605, %v603
  %v650 = vpack.c.b16 %v606, %v604
  %v651 = vpack.c.b16 %v609, %v607
  %v652 = vpack.c.b16 %v610, %v608
  %v653 = vpack.c.b16 %v613, %v611
  %v654 = vpack.c.b16 %v614, %v612
  %v655 = vpack.c.b16 %v617, %v615
  %v656 = vpack.c.b16 %v618, %v616
  %v657 = vpack.c.b16 %v621, %v619
  %v658 = vpack.c.b16 %v622, %v620
  %v659 = vpack.c.b16 %v625, %v623
  %v660 = vpack.c.b16 %v626, %v624
  %v661 = vpack.c.b16 %v629, %v627
  %v662 = vpack.c.b16 %v630, %v628
  %695 = vmatprep.subr.bf16.mxu0 %v646
  %696 = vmatpush1.bf16.msra.mxu0 %v645
  %697 = vmatprep.subr.bf16.mxu0 %v644
  %698 = vmatpush1.bf16.msra.mxu0 %v643
  %699 = vmatprep.subr.bf16.mxu0 %v642
  %700 = vmatpush1.bf16.msra.mxu0 %v641
  %701 = vmatprep.subr.bf16.mxu0 %v640
  %702 = vmatpush1.bf16.msra.mxu0 %v639
  %703 = vmatprep.subr.bf16.mxu0 %v638
  %704 = vmatpush1.bf16.msra.mxu0 %v637
  %705 = vmatprep.subr.bf16.mxu0 %v636
  %706 = vmatpush1.bf16.msra.mxu0 %v635
  %707 = vmatprep.subr.bf16.mxu0 %v634
  %708 = vmatpush1.bf16.msra.mxu0 %v633
  %709 = vmatprep.subr.bf16.mxu0 %v632
  %710 = vmatpush1.bf16.msra.mxu0 %v631
  %711 = vmatprep.subr.bf16.mxu0 %v662
  %712 = vmatpush2.bf16.msra.mxu0 %v661
  %713 = vmatprep.subr.bf16.mxu0 %v660
  %714 = vmatpush2.bf16.msra.mxu0 %v659
  %715 = vmatprep.subr.bf16.mxu0 %v658
  %716 = vmatpush2.bf16.msra.mxu0 %v657
  %717 = vmatprep.subr.bf16.mxu0 %v656
  %718 = vmatpush2.bf16.msra.mxu0 %v655
  %719 = vmatprep.subr.bf16.mxu0 %v654
  %720 = vmatpush2.bf16.msra.mxu0 %v653
  %721 = vmatprep.subr.bf16.mxu0 %v652
  %722 = vmatpush2.bf16.msra.mxu0 %v651
  %723 = vmatprep.subr.bf16.mxu0 %v650
  %724 = vmatpush2.bf16.msra.mxu0 %v649
  %725 = vmatprep.subr.bf16.mxu0 %v648
  %726 = vmatpush2.bf16.msra.mxu0 %v647
  %727 = vmatprep.mubr.bf16.mxu0 %v488
  %728 = vmatmul.mubr.bf16.gmra.mxu0 %v487
  %v729 = vpop.f32.mrf.mxu0
  %v730 = vadd.f32 0.0, %v729
  %v731 = vpop.f32.mrf.mxu0
  %v732 = vadd.f32 0.0, %v731
  %v733 = vpop.f32.mrf.mxu0
  %v734 = vadd.f32 0.0, %v733
  %v735 = vpop.f32.mrf.mxu0
  %v736 = vadd.f32 0.0, %v735
  %737 = vmatprep.mubr.bf16.mxu0 %v490
  %738 = vmatmul.mubr.bf16.gmra.mxu0 %v489
  %v739 = vpop.f32.mrf.mxu0
  %v740 = vadd.f32 0.0, %v739
  %v741 = vpop.f32.mrf.mxu0
  %v742 = vadd.f32 0.0, %v741
  %v743 = vpop.f32.mrf.mxu0
  %v744 = vadd.f32 0.0, %v743
  %v745 = vpop.f32.mrf.mxu0
  %v746 = vadd.f32 0.0, %v745
  %747 = vmatprep.mubr.bf16.mxu0 %v492
  %748 = vmatmul.mubr.bf16.gmra.mxu0 %v491
  %v749 = vpop.f32.mrf.mxu0
  %v750 = vadd.f32 0.0, %v749
  %v751 = vpop.f32.mrf.mxu0
  %v752 = vadd.f32 0.0, %v751
  %v753 = vpop.f32.mrf.mxu0
  %v754 = vadd.f32 0.0, %v753
  %v755 = vpop.f32.mrf.mxu0
  %v756 = vadd.f32 0.0, %v755
  %757 = vmatprep.mubr.bf16.mxu0 %v494
  %758 = vmatmul.mubr.bf16.gmra.mxu0 %v493
  %v759 = vpop.f32.mrf.mxu0
  %v760 = vadd.f32 0.0, %v759
  %v761 = vpop.f32.mrf.mxu0
  %v762 = vadd.f32 0.0, %v761
  %v763 = vpop.f32.mrf.mxu0
  %v764 = vadd.f32 0.0, %v763
  %v765 = vpop.f32.mrf.mxu0
  %v766 = vadd.f32 0.0, %v765
  %767 = vmatprep.mubr.bf16.mxu0 %v496
  %768 = vmatmul.mubr.bf16.gmra.mxu0 %v495
  %v769 = vpop.f32.mrf.mxu0
  %v770 = vadd.f32 0.0, %v769
  %v771 = vpop.f32.mrf.mxu0
  %v772 = vadd.f32 0.0, %v771
  %v773 = vpop.f32.mrf.mxu0
  %v774 = vadd.f32 0.0, %v773
  %v775 = vpop.f32.mrf.mxu0
  %v776 = vadd.f32 0.0, %v775
  %777 = vmatprep.mubr.bf16.mxu0 %v498
  %778 = vmatmul.mubr.bf16.gmra.mxu0 %v497
  %v779 = vpop.f32.mrf.mxu0
  %v780 = vadd.f32 0.0, %v779
  %v781 = vpop.f32.mrf.mxu0
  %v782 = vadd.f32 0.0, %v781
  %v783 = vpop.f32.mrf.mxu0
  %v784 = vadd.f32 0.0, %v783
  %v785 = vpop.f32.mrf.mxu0
  %v786 = vadd.f32 0.0, %v785
  %787 = vmatprep.mubr.bf16.mxu0 %v500
  %788 = vmatmul.mubr.bf16.gmra.mxu0 %v499
  %v789 = vpop.f32.mrf.mxu0
  %v790 = vadd.f32 0.0, %v789
  %v791 = vpop.f32.mrf.mxu0
  %v792 = vadd.f32 0.0, %v791
  %v793 = vpop.f32.mrf.mxu0
  %v794 = vadd.f32 0.0, %v793
  %v795 = vpop.f32.mrf.mxu0
  %v796 = vadd.f32 0.0, %v795
  %797 = vmatprep.mubr.bf16.mxu0 %v502
  %798 = vmatmul.mubr.bf16.gmra.mxu0 %v501
  %v799 = vpop.f32.mrf.mxu0
  %v800 = vadd.f32 0.0, %v799
  %v801 = vpop.f32.mrf.mxu0
  %v802 = vadd.f32 0.0, %v801
  %v803 = vpop.f32.mrf.mxu0
  %v804 = vadd.f32 0.0, %v803
  %v805 = vpop.f32.mrf.mxu0
  %v806 = vadd.f32 0.0, %v805
  %807 = vdwg.mxu0
  %v840 = vunpack.c.l.b16 %v274
  %v841 = vunpack.c.h.b16 %v274
  %v842 = vunpack.c.l.b16 %v275
  %v843 = vunpack.c.h.b16 %v275
  %v844 = vunpack.c.l.b16 %v276
  %v845 = vunpack.c.h.b16 %v276
  %v846 = vunpack.c.l.b16 %v277
  %v847 = vunpack.c.h.b16 %v277
  %v848 = vunpack.c.l.b16 %v278
  %v849 = vunpack.c.h.b16 %v278
  %v850 = vunpack.c.l.b16 %v279
  %v851 = vunpack.c.h.b16 %v279
  %v852 = vunpack.c.l.b16 %v280
  %v853 = vunpack.c.h.b16 %v280
  %v854 = vunpack.c.l.b16 %v281
  %v855 = vunpack.c.h.b16 %v281
  %v856 = vunpack.c.l.b16 %v282
  %v857 = vunpack.c.h.b16 %v282
  %v858 = vunpack.c.l.b16 %v283
  %v859 = vunpack.c.h.b16 %v283
  %v860 = vunpack.c.l.b16 %v284
  %v861 = vunpack.c.h.b16 %v284
  %v862 = vunpack.c.l.b16 %v285
  %v863 = vunpack.c.h.b16 %v285
  %v864 = vunpack.c.l.b16 %v286
  %v865 = vunpack.c.h.b16 %v286
  %v866 = vunpack.c.l.b16 %v287
  %v867 = vunpack.c.h.b16 %v287
  %v868 = vunpack.c.l.b16 %v288
  %v869 = vunpack.c.h.b16 %v288
  %v870 = vunpack.c.l.b16 %v289
  %v871 = vunpack.c.h.b16 %v289
  %v872 = vunpack.c.l.b16 %v290
  %v873 = vunpack.c.h.b16 %v290
  %v874 = vunpack.c.l.b16 %v291
  %v875 = vunpack.c.h.b16 %v291
  %v876 = vunpack.c.l.b16 %v292
  %v877 = vunpack.c.h.b16 %v292
  %v878 = vunpack.c.l.b16 %v293
  %v879 = vunpack.c.h.b16 %v293
  %v880 = vunpack.c.l.b16 %v294
  %v881 = vunpack.c.h.b16 %v294
  %v882 = vunpack.c.l.b16 %v295
  %v883 = vunpack.c.h.b16 %v295
  %v884 = vunpack.c.l.b16 %v296
  %v885 = vunpack.c.h.b16 %v296
  %v886 = vunpack.c.l.b16 %v297
  %v887 = vunpack.c.h.b16 %v297
  %v888 = vunpack.c.l.b16 %v298
  %v889 = vunpack.c.h.b16 %v298
  %v890 = vunpack.c.l.b16 %v299
  %v891 = vunpack.c.h.b16 %v299
  %v892 = vunpack.c.l.b16 %v300
  %v893 = vunpack.c.h.b16 %v300
  %v894 = vunpack.c.l.b16 %v301
  %v895 = vunpack.c.h.b16 %v301
  %v896 = vunpack.c.l.b16 %v302
  %v897 = vunpack.c.h.b16 %v302
  %v898 = vunpack.c.l.b16 %v303
  %v899 = vunpack.c.h.b16 %v303
  %v900 = vunpack.c.l.b16 %v304
  %v901 = vunpack.c.h.b16 %v304
  %v902 = vunpack.c.l.b16 %v305
  %v903 = vunpack.c.h.b16 %v305
  %v904 = vpack.c.b16 %v842, %v840
  %v905 = vpack.c.b16 %v843, %v841
  %v906 = vpack.c.b16 %v846, %v844
  %v907 = vpack.c.b16 %v847, %v845
  %v908 = vpack.c.b16 %v850, %v848
  %v909 = vpack.c.b16 %v851, %v849
  %v910 = vpack.c.b16 %v854, %v852
  %v911 = vpack.c.b16 %v855, %v853
  %v912 = vpack.c.b16 %v858, %v856
  %v913 = vpack.c.b16 %v859, %v857
  %v914 = vpack.c.b16 %v862, %v860
  %v915 = vpack.c.b16 %v863, %v861
  %v916 = vpack.c.b16 %v866, %v864
  %v917 = vpack.c.b16 %v867, %v865
  %v918 = vpack.c.b16 %v870, %v868
  %v919 = vpack.c.b16 %v871, %v869
  %v920 = vpack.c.b16 %v874, %v872
  %v921 = vpack.c.b16 %v875, %v873
  %v922 = vpack.c.b16 %v878, %v876
  %v923 = vpack.c.b16 %v879, %v877
  %v924 = vpack.c.b16 %v882, %v880
  %v925 = vpack.c.b16 %v883, %v881
  %v926 = vpack.c.b16 %v886, %v884
  %v927 = vpack.c.b16 %v887, %v885
  %v928 = vpack.c.b16 %v890, %v888
  %v929 = vpack.c.b16 %v891, %v889
  %v930 = vpack.c.b16 %v894, %v892
  %v931 = vpack.c.b16 %v895, %v893
  %v932 = vpack.c.b16 %v898, %v896
  %v933 = vpack.c.b16 %v899, %v897
  %v934 = vpack.c.b16 %v902, %v900
  %v935 = vpack.c.b16 %v903, %v901
  %968 = vmatprep.subr.bf16.mxu0 %v919
  %969 = vmatpush1.bf16.msra.mxu0 %v918
  %970 = vmatprep.subr.bf16.mxu0 %v917
  %971 = vmatpush1.bf16.msra.mxu0 %v916
  %972 = vmatprep.subr.bf16.mxu0 %v915
  %973 = vmatpush1.bf16.msra.mxu0 %v914
  %974 = vmatprep.subr.bf16.mxu0 %v913
  %975 = vmatpush1.bf16.msra.mxu0 %v912
  %976 = vmatprep.subr.bf16.mxu0 %v911
  %977 = vmatpush1.bf16.msra.mxu0 %v910
  %978 = vmatprep.subr.bf16.mxu0 %v909
  %979 = vmatpush1.bf16.msra.mxu0 %v908
  %980 = vmatprep.subr.bf16.mxu0 %v907
  %981 = vmatpush1.bf16.msra.mxu0 %v906
  %982 = vmatprep.subr.bf16.mxu0 %v905
  %983 = vmatpush1.bf16.msra.mxu0 %v904
  %984 = vmatprep.subr.bf16.mxu0 %v935
  %985 = vmatpush2.bf16.msra.mxu0 %v934
  %986 = vmatprep.subr.bf16.mxu0 %v933
  %987 = vmatpush2.bf16.msra.mxu0 %v932
  %988 = vmatprep.subr.bf16.mxu0 %v931
  %989 = vmatpush2.bf16.msra.mxu0 %v930
  %990 = vmatprep.subr.bf16.mxu0 %v929
  %991 = vmatpush2.bf16.msra.mxu0 %v928
  %992 = vmatprep.subr.bf16.mxu0 %v927
  %993 = vmatpush2.bf16.msra.mxu0 %v926
  %994 = vmatprep.subr.bf16.mxu0 %v925
  %995 = vmatpush2.bf16.msra.mxu0 %v924
  %996 = vmatprep.subr.bf16.mxu0 %v923
  %997 = vmatpush2.bf16.msra.mxu0 %v922
  %998 = vmatprep.subr.bf16.mxu0 %v921
  %999 = vmatpush2.bf16.msra.mxu0 %v920
  %1000 = vmatprep.mubr.bf16.mxu0 %v259
  %1001 = vmatmul.mubr.bf16.gmra.mxu0 %v258
  %v1002 = vpop.f32.mrf.mxu0
  %v1003 = vadd.f32 %v730, %v1002
  %v1004 = vpop.f32.mrf.mxu0
  %v1005 = vadd.f32 %v732, %v1004
  %v1006 = vpop.f32.mrf.mxu0
  %v1007 = vadd.f32 %v734, %v1006
  %v1008 = vpop.f32.mrf.mxu0
  %v1009 = vadd.f32 %v736, %v1008
  %1010 = vmatprep.mubr.bf16.mxu0 %v261
  %1011 = vmatmul.mubr.bf16.gmra.mxu0 %v260
  %v1012 = vpop.f32.mrf.mxu0
  %v1013 = vadd.f32 %v740, %v1012
  %v1014 = vpop.f32.mrf.mxu0
  %v1015 = vadd.f32 %v742, %v1014
  %v1016 = vpop.f32.mrf.mxu0
  %v1017 = vadd.f32 %v744, %v1016
  %v1018 = vpop.f32.mrf.mxu0
  %v1019 = vadd.f32 %v746, %v1018
  %1020 = vmatprep.mubr.bf16.mxu0 %v263
  %1021 = vmatmul.mubr.bf16.gmra.mxu0 %v262
  %v1022 = vpop.f32.mrf.mxu0
  %v1023 = vadd.f32 %v750, %v1022
  %v1024 = vpop.f32.mrf.mxu0
  %v1025 = vadd.f32 %v752, %v1024
  %v1026 = vpop.f32.mrf.mxu0
  %v1027 = vadd.f32 %v754, %v1026
  %v1028 = vpop.f32.mrf.mxu0
  %v1029 = vadd.f32 %v756, %v1028
  %1030 = vmatprep.mubr.bf16.mxu0 %v265
  %1031 = vmatmul.mubr.bf16.gmra.mxu0 %v264
  %v1032 = vpop.f32.mrf.mxu0
  %v1033 = vadd.f32 %v760, %v1032
  %v1034 = vpop.f32.mrf.mxu0
  %v1035 = vadd.f32 %v762, %v1034
  %v1036 = vpop.f32.mrf.mxu0
  %v1037 = vadd.f32 %v764, %v1036
  %v1038 = vpop.f32.mrf.mxu0
  %v1039 = vadd.f32 %v766, %v1038
  %1040 = vmatprep.mubr.bf16.mxu0 %v267
  %1041 = vmatmul.mubr.bf16.gmra.mxu0 %v266
  %v1042 = vpop.f32.mrf.mxu0
  %v1043 = vadd.f32 %v770, %v1042
  %v1044 = vpop.f32.mrf.mxu0
  %v1045 = vadd.f32 %v772, %v1044
  %v1046 = vpop.f32.mrf.mxu0
  %v1047 = vadd.f32 %v774, %v1046
  %v1048 = vpop.f32.mrf.mxu0
  %v1049 = vadd.f32 %v776, %v1048
  %1050 = vmatprep.mubr.bf16.mxu0 %v269
  %1051 = vmatmul.mubr.bf16.gmra.mxu0 %v268
  %v1052 = vpop.f32.mrf.mxu0
  %v1053 = vadd.f32 %v780, %v1052
  %v1054 = vpop.f32.mrf.mxu0
  %v1055 = vadd.f32 %v782, %v1054
  %v1056 = vpop.f32.mrf.mxu0
  %v1057 = vadd.f32 %v784, %v1056
  %v1058 = vpop.f32.mrf.mxu0
  %v1059 = vadd.f32 %v786, %v1058
  %1060 = vmatprep.mubr.bf16.mxu0 %v271
  %1061 = vmatmul.mubr.bf16.gmra.mxu0 %v270
  %v1062 = vpop.f32.mrf.mxu0
  %v1063 = vadd.f32 %v790, %v1062
  %v1064 = vpop.f32.mrf.mxu0
  %v1065 = vadd.f32 %v792, %v1064
  %v1066 = vpop.f32.mrf.mxu0
  %v1067 = vadd.f32 %v794, %v1066
  %v1068 = vpop.f32.mrf.mxu0
  %v1069 = vadd.f32 %v796, %v1068
  %1070 = vmatprep.mubr.bf16.mxu0 %v273
  %1071 = vmatmul.mubr.bf16.gmra.mxu0 %v272
  %v1072 = vpop.f32.mrf.mxu0
  %v1073 = vadd.f32 %v800, %v1072
  %v1074 = vpop.f32.mrf.mxu0
  %v1075 = vadd.f32 %v802, %v1074
  %v1076 = vpop.f32.mrf.mxu0
  %v1077 = vadd.f32 %v804, %v1076
  %v1078 = vpop.f32.mrf.mxu0
  %v1079 = vadd.f32 %v806, %v1078
  %1080 = vdwg.mxu0
  %v1081 = vld [vmem:[%s1 + $0x10] sm:$0xff]
  %v1082 = vld [vmem:[%s1 + $0x30] sm:$0xff]
  %v1083 = vld [vmem:[%s1 + $0x50] sm:$0xff]
  %v1084 = vld [vmem:[%s1 + $0x70] sm:$0xff]
  %v1085 = vld [vmem:[%s2 + $0x4] sm:$0x3]
  %v1087 = vlaneseq
  %v1088 = vshrl.u32 %v1087, 7
  %v1089 = vsub.s32 0, %v1088
  %v1090 = vrot.slane %v1085, %v1089
  %v1091 = vlaneseq
  %v1092 = vshrl.u32 %v1091, 7
  %v1093 = vsub.s32 1, %v1092
  %v1094 = vrot.slane %v1085, %v1093
  %v1101 = vunpack.c.l.b16 %v1081
  %v1102 = vunpack.c.h.b16 %v1081
  %v1103 = vunpack.c.l.b16 %v1082
  %v1104 = vunpack.c.h.b16 %v1082
  %v1105 = vunpack.c.l.b16 %v1083
  %v1106 = vunpack.c.h.b16 %v1083
  %v1107 = vunpack.c.l.b16 %v1084
  %v1108 = vunpack.c.h.b16 %v1084
  %v1109 = vpack.c.b16 %v1103, %v1101
  %v1110 = vpack.c.b16 %v1104, %v1102
  %v1111 = vpack.c.b16 %v1107, %v1105
  %v1112 = vpack.c.b16 %v1108, %v1106
  %1117 = vmatprep.subr.bf16.mxu0 0
  %1118 = vmatpush1.bf16.msra.mxu0 0
  %1119 = vmatprep.subr.bf16.mxu0 0
  %1120 = vmatpush1.bf16.msra.mxu0 0
  %1121 = vmatprep.subr.bf16.mxu0 0
  %1122 = vmatpush1.bf16.msra.mxu0 0
  %1123 = vmatprep.subr.bf16.mxu0 0
  %1124 = vmatpush1.bf16.msra.mxu0 0
  %1125 = vmatprep.subr.bf16.mxu0 0
  %1126 = vmatpush1.bf16.msra.mxu0 0
  %1127 = vmatprep.subr.bf16.mxu0 0
  %1128 = vmatpush1.bf16.msra.mxu0 0
  %1129 = vmatprep.subr.bf16.mxu0 %v1112
  %1130 = vmatpush1.bf16.msra.mxu0 %v1111
  %1131 = vmatprep.subr.bf16.mxu0 %v1110
  %1132 = vmatpush1.bf16.msra.mxu0 %v1109
  %1133 = vmatprep.subr.bf16.mxu0 0
  %1134 = vmatpush2.bf16.msra.mxu0 0
  %1135 = vmatprep.subr.bf16.mxu0 0
  %1136 = vmatpush2.bf16.msra.mxu0 0
  %1137 = vmatprep.subr.bf16.mxu0 0
  %1138 = vmatpush2.bf16.msra.mxu0 0
  %1139 = vmatprep.subr.bf16.mxu0 0
  %1140 = vmatpush2.bf16.msra.mxu0 0
  %1141 = vmatprep.subr.bf16.mxu0 0
  %1142 = vmatpush2.bf16.msra.mxu0 0
  %1143 = vmatprep.subr.bf16.mxu0 0
  %1144 = vmatpush2.bf16.msra.mxu0 0
  %1145 = vmatprep.subr.bf16.mxu0 0
  %1146 = vmatpush2.bf16.msra.mxu0 0
  %1147 = vmatprep.subr.bf16.mxu0 0
  %1148 = vmatpush2.bf16.msra.mxu0 0
  %1149 = vmatprep.mubr.bf16.mxu0 0
  %1150 = vmatmul.mubr.bf16.gmra.mxu0 %v90
  %v1151 = vpop.f32.mrf.mxu0
  %v1152 = vadd.f32 %v1090, %v1151
  %v1153 = vpop.f32.mrf.mxu0
  %v1154 = vadd.f32 %v1094, %v1153
  %v1155 = vpop.f32.mrf.mxu0
  %v1156 = vadd.f32 %v1090, %v1155
  %v1157 = vpop.f32.mrf.mxu0
  %v1158 = vadd.f32 %v1094, %v1157
  %1159 = vmatprep.mubr.bf16.mxu0 0
  %1160 = vmatmul.mubr.bf16.gmra.mxu0 %v93
  %v1161 = vpop.f32.mrf.mxu0
  %v1162 = vadd.f32 %v1090, %v1161
  %v1163 = vpop.f32.mrf.mxu0
  %v1164 = vadd.f32 %v1094, %v1163
  %v1165 = vpop.f32.mrf.mxu0
  %v1166 = vadd.f32 %v1090, %v1165
  %v1167 = vpop.f32.mrf.mxu0
  %v1168 = vadd.f32 %v1094, %v1167
  %1169 = vmatprep.mubr.bf16.mxu0 0
  %1170 = vmatmul.mubr.bf16.gmra.mxu0 %v96
  %v1171 = vpop.f32.mrf.mxu0
  %v1172 = vadd.f32 %v1090, %v1171
  %v1173 = vpop.f32.mrf.mxu0
  %v1174 = vadd.f32 %v1094, %v1173
  %v1175 = vpop.f32.mrf.mxu0
  %v1176 = vadd.f32 %v1090, %v1175
  %v1177 = vpop.f32.mrf.mxu0
  %v1178 = vadd.f32 %v1094, %v1177
  %1179 = vmatprep.mubr.bf16.mxu0 0
  %1180 = vmatmul.mubr.bf16.gmra.mxu0 %v99
  %v1181 = vpop.f32.mrf.mxu0
  %v1182 = vadd.f32 %v1090, %v1181
  %v1183 = vpop.f32.mrf.mxu0
  %v1184 = vadd.f32 %v1094, %v1183
  %v1185 = vpop.f32.mrf.mxu0
  %v1186 = vadd.f32 %v1090, %v1185
  %v1187 = vpop.f32.mrf.mxu0
  %v1188 = vadd.f32 %v1094, %v1187
  %1189 = vmatprep.mubr.bf16.mxu0 0
  %1190 = vmatmul.mubr.bf16.gmra.mxu0 %v102
  %v1191 = vpop.f32.mrf.mxu0
  %v1192 = vadd.f32 %v1090, %v1191
  %v1193 = vpop.f32.mrf.mxu0
  %v1194 = vadd.f32 %v1094, %v1193
  %v1195 = vpop.f32.mrf.mxu0
  %v1196 = vadd.f32 %v1090, %v1195
  %v1197 = vpop.f32.mrf.mxu0
  %v1198 = vadd.f32 %v1094, %v1197
  %1199 = vmatprep.mubr.bf16.mxu0 0
  %1200 = vmatmul.mubr.bf16.gmra.mxu0 %v105
  %v1201 = vpop.f32.mrf.mxu0
  %v1202 = vadd.f32 %v1090, %v1201
  %v1203 = vpop.f32.mrf.mxu0
  %v1204 = vadd.f32 %v1094, %v1203
  %v1205 = vpop.f32.mrf.mxu0
  %v1206 = vadd.f32 %v1090, %v1205
  %v1207 = vpop.f32.mrf.mxu0
  %v1208 = vadd.f32 %v1094, %v1207
  %1209 = vmatprep.mubr.bf16.mxu0 0
  %1210 = vmatmul.mubr.bf16.gmra.mxu0 %v108
  %v1211 = vpop.f32.mrf.mxu0
  %v1212 = vadd.f32 %v1090, %v1211
  %v1213 = vpop.f32.mrf.mxu0
  %v1214 = vadd.f32 %v1094, %v1213
  %v1215 = vpop.f32.mrf.mxu0
  %v1216 = vadd.f32 %v1090, %v1215
  %v1217 = vpop.f32.mrf.mxu0
  %v1218 = vadd.f32 %v1094, %v1217
  %1219 = vmatprep.mubr.bf16.mxu0 0
  %1220 = vmatmul.mubr.bf16.gmra.mxu0 %v111
  %v1221 = vpop.f32.mrf.mxu0
  %v1222 = vadd.f32 %v1090, %v1221
  %v1223 = vpop.f32.mrf.mxu0
  %v1224 = vadd.f32 %v1094, %v1223
  %v1225 = vpop.f32.mrf.mxu0
  %v1226 = vadd.f32 %v1090, %v1225
  %v1227 = vpop.f32.mrf.mxu0
  %v1228 = vadd.f32 %v1094, %v1227
  %1229 = vdwg.mxu0
  %v1230 = vmax.f32 %v1152, 0.0
  %v1231 = vmax.f32 %v1154, 0.0
  %v1232 = vmax.f32 %v1156, 0.0
  %v1233 = vmax.f32 %v1158, 0.0
  %v1234 = vmax.f32 %v1162, 0.0
  %v1235 = vmax.f32 %v1164, 0.0
  %v1236 = vmax.f32 %v1166, 0.0
  %v1237 = vmax.f32 %v1168, 0.0
  %v1238 = vmax.f32 %v1172, 0.0
  %v1239 = vmax.f32 %v1174, 0.0
  %v1240 = vmax.f32 %v1176, 0.0
  %v1241 = vmax.f32 %v1178, 0.0
  %v1242 = vmax.f32 %v1182, 0.0
  %v1243 = vmax.f32 %v1184, 0.0
  %v1244 = vmax.f32 %v1186, 0.0
  %v1245 = vmax.f32 %v1188, 0.0
  %v1246 = vmax.f32 %v1192, 0.0
  %v1247 = vmax.f32 %v1194, 0.0
  %v1248 = vmax.f32 %v1196, 0.0
  %v1249 = vmax.f32 %v1198, 0.0
  %v1250 = vmax.f32 %v1202, 0.0
  %v1251 = vmax.f32 %v1204, 0.0
  %v1252 = vmax.f32 %v1206, 0.0
  %v1253 = vmax.f32 %v1208, 0.0
  %v1254 = vmax.f32 %v1212, 0.0
  %v1255 = vmax.f32 %v1214, 0.0
  %v1256 = vmax.f32 %v1216, 0.0
  %v1257 = vmax.f32 %v1218, 0.0
  %v1258 = vmax.f32 %v1222, 0.0
  %v1259 = vmax.f32 %v1224, 0.0
  %v1260 = vmax.f32 %v1226, 0.0
  %v1261 = vmax.f32 %v1228, 0.0
  %v1262 = vpack.c.bf16 %v1232, %v1230
  %v1263 = vpack.c.bf16 %v1233, %v1231
  %v1264 = vpack.c.bf16 %v1236, %v1234
  %v1265 = vpack.c.bf16 %v1237, %v1235
  %v1266 = vpack.c.bf16 %v1240, %v1238
  %v1267 = vpack.c.bf16 %v1241, %v1239
  %v1268 = vpack.c.bf16 %v1244, %v1242
  %v1269 = vpack.c.bf16 %v1245, %v1243
  %v1270 = vpack.c.bf16 %v1248, %v1246
  %v1271 = vpack.c.bf16 %v1249, %v1247
  %v1272 = vpack.c.bf16 %v1252, %v1250
  %v1273 = vpack.c.bf16 %v1253, %v1251
  %v1274 = vpack.c.bf16 %v1256, %v1254
  %v1275 = vpack.c.bf16 %v1257, %v1255
  %v1276 = vpack.c.bf16 %v1260, %v1258
  %v1277 = vpack.c.bf16 %v1261, %v1259
  %v1278 = vld [vmem:[%s3 + $0x200] sm:$0xff]
  %v1279 = vld [vmem:[%s3 + $0x208] sm:$0xff]
  %v1280 = vld [vmem:[%s3 + $0x210] sm:$0xff]
  %v1281 = vld [vmem:[%s3 + $0x218] sm:$0xff]
  %v1282 = vld [vmem:[%s3 + $0x220] sm:$0xff]
  %v1283 = vld [vmem:[%s3 + $0x228] sm:$0xff]
  %v1284 = vld [vmem:[%s3 + $0x230] sm:$0xff]
  %v1285 = vld [vmem:[%s3 + $0x238] sm:$0xff]
  %v1286 = vld [vmem:[%s3 + $0x240] sm:$0xff]
  %v1287 = vld [vmem:[%s3 + $0x248] sm:$0xff]
  %v1288 = vld [vmem:[%s3 + $0x250] sm:$0xff]
  %v1289 = vld [vmem:[%s3 + $0x258] sm:$0xff]
  %v1290 = vld [vmem:[%s3 + $0x260] sm:$0xff]
  %v1291 = vld [vmem:[%s3 + $0x268] sm:$0xff]
  %v1292 = vld [vmem:[%s3 + $0x270] sm:$0xff]
  %v1293 = vld [vmem:[%s3 + $0x278] sm:$0xff]
  %v1294 = vld [vmem:[%s3 + $0x280] sm:$0xff]
  %v1295 = vld [vmem:[%s3 + $0x288] sm:$0xff]
  %v1296 = vld [vmem:[%s3 + $0x290] sm:$0xff]
  %v1297 = vld [vmem:[%s3 + $0x298] sm:$0xff]
  %v1298 = vld [vmem:[%s3 + $0x2a0] sm:$0xff]
  %v1299 = vld [vmem:[%s3 + $0x2a8] sm:$0xff]
  %v1300 = vld [vmem:[%s3 + $0x2b0] sm:$0xff]
  %v1301 = vld [vmem:[%s3 + $0x2b8] sm:$0xff]
  %v1302 = vld [vmem:[%s3 + $0x2c0] sm:$0xff]
  %v1303 = vld [vmem:[%s3 + $0x2c8] sm:$0xff]
  %v1304 = vld [vmem:[%s3 + $0x2d0] sm:$0xff]
  %v1305 = vld [vmem:[%s3 + $0x2d8] sm:$0xff]
  %v1306 = vld [vmem:[%s3 + $0x2e0] sm:$0xff]
  %v1307 = vld [vmem:[%s3 + $0x2e8] sm:$0xff]
  %v1308 = vld [vmem:[%s3 + $0x2f0] sm:$0xff]
  %v1309 = vld [vmem:[%s3 + $0x2f8] sm:$0xff]
  %v1342 = vunpack.c.l.b16 %v1278
  %v1343 = vunpack.c.h.b16 %v1278
  %v1344 = vunpack.c.l.b16 %v1279
  %v1345 = vunpack.c.h.b16 %v1279
  %v1346 = vunpack.c.l.b16 %v1280
  %v1347 = vunpack.c.h.b16 %v1280
  %v1348 = vunpack.c.l.b16 %v1281
  %v1349 = vunpack.c.h.b16 %v1281
  %v1350 = vunpack.c.l.b16 %v1282
  %v1351 = vunpack.c.h.b16 %v1282
  %v1352 = vunpack.c.l.b16 %v1283
  %v1353 = vunpack.c.h.b16 %v1283
  %v1354 = vunpack.c.l.b16 %v1284
  %v1355 = vunpack.c.h.b16 %v1284
  %v1356 = vunpack.c.l.b16 %v1285
  %v1357 = vunpack.c.h.b16 %v1285
  %v1358 = vunpack.c.l.b16 %v1286
  %v1359 = vunpack.c.h.b16 %v1286
  %v1360 = vunpack.c.l.b16 %v1287
  %v1361 = vunpack.c.h.b16 %v1287
  %v1362 = vunpack.c.l.b16 %v1288
  %v1363 = vunpack.c.h.b16 %v1288
  %v1364 = vunpack.c.l.b16 %v1289
  %v1365 = vunpack.c.h.b16 %v1289
  %v1366 = vunpack.c.l.b16 %v1290
  %v1367 = vunpack.c.h.b16 %v1290
  %v1368 = vunpack.c.l.b16 %v1291
  %v1369 = vunpack.c.h.b16 %v1291
  %v1370 = vunpack.c.l.b16 %v1292
  %v1371 = vunpack.c.h.b16 %v1292
  %v1372 = vunpack.c.l.b16 %v1293
  %v1373 = vunpack.c.h.b16 %v1293
  %v1374 = vunpack.c.l.b16 %v1294
  %v1375 = vunpack.c.h.b16 %v1294
  %v1376 = vunpack.c.l.b16 %v1295
  %v1377 = vunpack.c.h.b16 %v1295
  %v1378 = vunpack.c.l.b16 %v1296
  %v1379 = vunpack.c.h.b16 %v1296
  %v1380 = vunpack.c.l.b16 %v1297
  %v1381 = vunpack.c.h.b16 %v1297
  %v1382 = vunpack.c.l.b16 %v1298
  %v1383 = vunpack.c.h.b16 %v1298
  %v1384 = vunpack.c.l.b16 %v1299
  %v1385 = vunpack.c.h.b16 %v1299
  %v1386 = vunpack.c.l.b16 %v1300
  %v1387 = vunpack.c.h.b16 %v1300
  %v1388 = vunpack.c.l.b16 %v1301
  %v1389 = vunpack.c.h.b16 %v1301
  %v1390 = vunpack.c.l.b16 %v1302
  %v1391 = vunpack.c.h.b16 %v1302
  %v1392 = vunpack.c.l.b16 %v1303
  %v1393 = vunpack.c.h.b16 %v1303
  %v1394 = vunpack.c.l.b16 %v1304
  %v1395 = vunpack.c.h.b16 %v1304
  %v1396 = vunpack.c.l.b16 %v1305
  %v1397 = vunpack.c.h.b16 %v1305
  %v1398 = vunpack.c.l.b16 %v1306
  %v1399 = vunpack.c.h.b16 %v1306
  %v1400 = vunpack.c.l.b16 %v1307
  %v1401 = vunpack.c.h.b16 %v1307
  %v1402 = vunpack.c.l.b16 %v1308
  %v1403 = vunpack.c.h.b16 %v1308
  %v1404 = vunpack.c.l.b16 %v1309
  %v1405 = vunpack.c.h.b16 %v1309
  %v1406 = vpack.c.b16 %v1344, %v1342
  %v1407 = vpack.c.b16 %v1345, %v1343
  %v1408 = vpack.c.b16 %v1348, %v1346
  %v1409 = vpack.c.b16 %v1349, %v1347
  %v1410 = vpack.c.b16 %v1352, %v1350
  %v1411 = vpack.c.b16 %v1353, %v1351
  %v1412 = vpack.c.b16 %v1356, %v1354
  %v1413 = vpack.c.b16 %v1357, %v1355
  %v1414 = vpack.c.b16 %v1360, %v1358
  %v1415 = vpack.c.b16 %v1361, %v1359
  %v1416 = vpack.c.b16 %v1364, %v1362
  %v1417 = vpack.c.b16 %v1365, %v1363
  %v1418 = vpack.c.b16 %v1368, %v1366
  %v1419 = vpack.c.b16 %v1369, %v1367
  %v1420 = vpack.c.b16 %v1372, %v1370
  %v1421 = vpack.c.b16 %v1373, %v1371
  %v1422 = vpack.c.b16 %v1376, %v1374
  %v1423 = vpack.c.b16 %v1377, %v1375
  %v1424 = vpack.c.b16 %v1380, %v1378
  %v1425 = vpack.c.b16 %v1381, %v1379
  %v1426 = vpack.c.b16 %v1384, %v1382
  %v1427 = vpack.c.b16 %v1385, %v1383
  %v1428 = vpack.c.b16 %v1388, %v1386
  %v1429 = vpack.c.b16 %v1389, %v1387
  %v1430 = vpack.c.b16 %v1392, %v1390
  %v1431 = vpack.c.b16 %v1393, %v1391
  %v1432 = vpack.c.b16 %v1396, %v1394
  %v1433 = vpack.c.b16 %v1397, %v1395
  %v1434 = vpack.c.b16 %v1400, %v1398
  %v1435 = vpack.c.b16 %v1401, %v1399
  %v1436 = vpack.c.b16 %v1404, %v1402
  %v1437 = vpack.c.b16 %v1405, %v1403
  %1470 = vmatprep.subr.bf16.mxu0 %v1421
  %1471 = vmatpush1.bf16.msra.mxu0 %v1420
  %1472 = vmatprep.subr.bf16.mxu0 %v1419
  %1473 = vmatpush1.bf16.msra.mxu0 %v1418
  %1474 = vmatprep.subr.bf16.mxu0 %v1417
  %1475 = vmatpush1.bf16.msra.mxu0 %v1416
  %1476 = vmatprep.subr.bf16.mxu0 %v1415
  %1477 = vmatpush1.bf16.msra.mxu0 %v1414
  %1478 = vmatprep.subr.bf16.mxu0 %v1413
  %1479 = vmatpush1.bf16.msra.mxu0 %v1412
  %1480 = vmatprep.subr.bf16.mxu0 %v1411
  %1481 = vmatpush1.bf16.msra.mxu0 %v1410
  %1482 = vmatprep.subr.bf16.mxu0 %v1409
  %1483 = vmatpush1.bf16.msra.mxu0 %v1408
  %1484 = vmatprep.subr.bf16.mxu0 %v1407
  %1485 = vmatpush1.bf16.msra.mxu0 %v1406
  %1486 = vmatprep.subr.bf16.mxu0 %v1437
  %1487 = vmatpush2.bf16.msra.mxu0 %v1436
  %1488 = vmatprep.subr.bf16.mxu0 %v1435
  %1489 = vmatpush2.bf16.msra.mxu0 %v1434
  %1490 = vmatprep.subr.bf16.mxu0 %v1433
  %1491 = vmatpush2.bf16.msra.mxu0 %v1432
  %1492 = vmatprep.subr.bf16.mxu0 %v1431
  %1493 = vmatpush2.bf16.msra.mxu0 %v1430
  %1494 = vmatprep.subr.bf16.mxu0 %v1429
  %1495 = vmatpush2.bf16.msra.mxu0 %v1428
  %1496 = vmatprep.subr.bf16.mxu0 %v1427
  %1497 = vmatpush2.bf16.msra.mxu0 %v1426
  %1498 = vmatprep.subr.bf16.mxu0 %v1425
  %1499 = vmatpush2.bf16.msra.mxu0 %v1424
  %1500 = vmatprep.subr.bf16.mxu0 %v1423
  %1501 = vmatpush2.bf16.msra.mxu0 %v1422
  %1502 = vmatprep.mubr.bf16.mxu0 %v1263
  %1503 = vmatmul.mubr.bf16.gmra.mxu0 %v1262
  %v1504 = vpop.f32.mrf.mxu0
  %v1505 = vadd.f32 0.0, %v1504
  %v1506 = vpop.f32.mrf.mxu0
  %v1507 = vadd.f32 0.0, %v1506
  %v1508 = vpop.f32.mrf.mxu0
  %v1509 = vadd.f32 0.0, %v1508
  %v1510 = vpop.f32.mrf.mxu0
  %v1511 = vadd.f32 0.0, %v1510
  %1512 = vmatprep.mubr.bf16.mxu0 %v1265
  %1513 = vmatmul.mubr.bf16.gmra.mxu0 %v1264
  %v1514 = vpop.f32.mrf.mxu0
  %v1515 = vadd.f32 0.0, %v1514
  %v1516 = vpop.f32.mrf.mxu0
  %v1517 = vadd.f32 0.0, %v1516
  %v1518 = vpop.f32.mrf.mxu0
  %v1519 = vadd.f32 0.0, %v1518
  %v1520 = vpop.f32.mrf.mxu0
  %v1521 = vadd.f32 0.0, %v1520
  %1522 = vmatprep.mubr.bf16.mxu0 %v1267
  %1523 = vmatmul.mubr.bf16.gmra.mxu0 %v1266
  %v1524 = vpop.f32.mrf.mxu0
  %v1525 = vadd.f32 0.0, %v1524
  %v1526 = vpop.f32.mrf.mxu0
  %v1527 = vadd.f32 0.0, %v1526
  %v1528 = vpop.f32.mrf.mxu0
  %v1529 = vadd.f32 0.0, %v1528
  %v1530 = vpop.f32.mrf.mxu0
  %v1531 = vadd.f32 0.0, %v1530
  %1532 = vmatprep.mubr.bf16.mxu0 %v1269
  %1533 = vmatmul.mubr.bf16.gmra.mxu0 %v1268
  %v1534 = vpop.f32.mrf.mxu0
  %v1535 = vadd.f32 0.0, %v1534
  %v1536 = vpop.f32.mrf.mxu0
  %v1537 = vadd.f32 0.0, %v1536
  %v1538 = vpop.f32.mrf.mxu0
  %v1539 = vadd.f32 0.0, %v1538
  %v1540 = vpop.f32.mrf.mxu0
  %v1541 = vadd.f32 0.0, %v1540
  %1542 = vmatprep.mubr.bf16.mxu0 %v1271
  %1543 = vmatmul.mubr.bf16.gmra.mxu0 %v1270
  %v1544 = vpop.f32.mrf.mxu0
  %v1545 = vadd.f32 0.0, %v1544
  %v1546 = vpop.f32.mrf.mxu0
  %v1547 = vadd.f32 0.0, %v1546
  %v1548 = vpop.f32.mrf.mxu0
  %v1549 = vadd.f32 0.0, %v1548
  %v1550 = vpop.f32.mrf.mxu0
  %v1551 = vadd.f32 0.0, %v1550
  %1552 = vmatprep.mubr.bf16.mxu0 %v1273
  %1553 = vmatmul.mubr.bf16.gmra.mxu0 %v1272
  %v1554 = vpop.f32.mrf.mxu0
  %v1555 = vadd.f32 0.0, %v1554
  %v1556 = vpop.f32.mrf.mxu0
  %v1557 = vadd.f32 0.0, %v1556
  %v1558 = vpop.f32.mrf.mxu0
  %v1559 = vadd.f32 0.0, %v1558
  %v1560 = vpop.f32.mrf.mxu0
  %v1561 = vadd.f32 0.0, %v1560
  %1562 = vmatprep.mubr.bf16.mxu0 %v1275
  %1563 = vmatmul.mubr.bf16.gmra.mxu0 %v1274
  %v1564 = vpop.f32.mrf.mxu0
  %v1565 = vadd.f32 0.0, %v1564
  %v1566 = vpop.f32.mrf.mxu0
  %v1567 = vadd.f32 0.0, %v1566
  %v1568 = vpop.f32.mrf.mxu0
  %v1569 = vadd.f32 0.0, %v1568
  %v1570 = vpop.f32.mrf.mxu0
  %v1571 = vadd.f32 0.0, %v1570
  %1572 = vmatprep.mubr.bf16.mxu0 %v1277
  %1573 = vmatmul.mubr.bf16.gmra.mxu0 %v1276
  %v1574 = vpop.f32.mrf.mxu0
  %v1575 = vadd.f32 0.0, %v1574
  %v1576 = vpop.f32.mrf.mxu0
  %v1577 = vadd.f32 0.0, %v1576
  %v1578 = vpop.f32.mrf.mxu0
  %v1579 = vadd.f32 0.0, %v1578
  %v1580 = vpop.f32.mrf.mxu0
  %v1581 = vadd.f32 0.0, %v1580
  %1582 = vdwg.mxu0
  %v1583 = vadd.f32 %v1003, %v1505
  %v1584 = vadd.f32 %v1005, %v1507
  %v1585 = vadd.f32 %v1007, %v1509
  %v1586 = vadd.f32 %v1009, %v1511
  %v1587 = vadd.f32 %v1013, %v1515
  %v1588 = vadd.f32 %v1015, %v1517
  %v1589 = vadd.f32 %v1017, %v1519
  %v1590 = vadd.f32 %v1019, %v1521
  %v1591 = vadd.f32 %v1023, %v1525
  %v1592 = vadd.f32 %v1025, %v1527
  %v1593 = vadd.f32 %v1027, %v1529
  %v1594 = vadd.f32 %v1029, %v1531
  %v1595 = vadd.f32 %v1033, %v1535
  %v1596 = vadd.f32 %v1035, %v1537
  %v1597 = vadd.f32 %v1037, %v1539
  %v1598 = vadd.f32 %v1039, %v1541
  %v1599 = vadd.f32 %v1043, %v1545
  %v1600 = vadd.f32 %v1045, %v1547
  %v1601 = vadd.f32 %v1047, %v1549
  %v1602 = vadd.f32 %v1049, %v1551
  %v1603 = vadd.f32 %v1053, %v1555
  %v1604 = vadd.f32 %v1055, %v1557
  %v1605 = vadd.f32 %v1057, %v1559
  %v1606 = vadd.f32 %v1059, %v1561
  %v1607 = vadd.f32 %v1063, %v1565
  %v1608 = vadd.f32 %v1065, %v1567
  %v1609 = vadd.f32 %v1067, %v1569
  %v1610 = vadd.f32 %v1069, %v1571
  %v1611 = vadd.f32 %v1073, %v1575
  %v1612 = vadd.f32 %v1075, %v1577
  %v1613 = vadd.f32 %v1077, %v1579
  %v1614 = vadd.f32 %v1079, %v1581
  %v1615 = vld [vmem:[%s1 + $0x18] sm:$0xff]
  %v1616 = vld [vmem:[%s1 + $0x38] sm:$0xff]
  %v1617 = vld [vmem:[%s1 + $0x58] sm:$0xff]
  %v1618 = vld [vmem:[%s1 + $0x78] sm:$0xff]
  %v1619 = vld [vmem:[%s2 + $0x6] sm:$0x3]
  %v1621 = vlaneseq
  %v1622 = vshrl.u32 %v1621, 7
  %v1623 = vsub.s32 0, %v1622
  %v1624 = vrot.slane %v1619, %v1623
  %v1625 = vlaneseq
  %v1626 = vshrl.u32 %v1625, 7
  %v1627 = vsub.s32 1, %v1626
  %v1628 = vrot.slane %v1619, %v1627
  %v1635 = vunpack.c.l.b16 %v1615
  %v1636 = vunpack.c.h.b16 %v1615
  %v1637 = vunpack.c.l.b16 %v1616
  %v1638 = vunpack.c.h.b16 %v1616
  %v1639 = vunpack.c.l.b16 %v1617
  %v1640 = vunpack.c.h.b16 %v1617
  %v1641 = vunpack.c.l.b16 %v1618
  %v1642 = vunpack.c.h.b16 %v1618
  %v1643 = vpack.c.b16 %v1637, %v1635
  %v1644 = vpack.c.b16 %v1638, %v1636
  %v1645 = vpack.c.b16 %v1641, %v1639
  %v1646 = vpack.c.b16 %v1642, %v1640
  %1651 = vmatprep.subr.bf16.mxu0 0
  %1652 = vmatpush1.bf16.msra.mxu0 0
  %1653 = vmatprep.subr.bf16.mxu0 0
  %1654 = vmatpush1.bf16.msra.mxu0 0
  %1655 = vmatprep.subr.bf16.mxu0 0
  %1656 = vmatpush1.bf16.msra.mxu0 0
  %1657 = vmatprep.subr.bf16.mxu0 0
  %1658 = vmatpush1.bf16.msra.mxu0 0
  %1659 = vmatprep.subr.bf16.mxu0 0
  %1660 = vmatpush1.bf16.msra.mxu0 0
  %1661 = vmatprep.subr.bf16.mxu0 0
  %1662 = vmatpush1.bf16.msra.mxu0 0
  %1663 = vmatprep.subr.bf16.mxu0 %v1646
  %1664 = vmatpush1.bf16.msra.mxu0 %v1645
  %1665 = vmatprep.subr.bf16.mxu0 %v1644
  %1666 = vmatpush1.bf16.msra.mxu0 %v1643
  %1667 = vmatprep.subr.bf16.mxu0 0
  %1668 = vmatpush2.bf16.msra.mxu0 0
  %1669 = vmatprep.subr.bf16.mxu0 0
  %1670 = vmatpush2.bf16.msra.mxu0 0
  %1671 = vmatprep.subr.bf16.mxu0 0
  %1672 = vmatpush2.bf16.msra.mxu0 0
  %1673 = vmatprep.subr.bf16.mxu0 0
  %1674 = vmatpush2.bf16.msra.mxu0 0
  %1675 = vmatprep.subr.bf16.mxu0 0
  %1676 = vmatpush2.bf16.msra.mxu0 0
  %1677 = vmatprep.subr.bf16.mxu0 0
  %1678 = vmatpush2.bf16.msra.mxu0 0
  %1679 = vmatprep.subr.bf16.mxu0 0
  %1680 = vmatpush2.bf16.msra.mxu0 0
  %1681 = vmatprep.subr.bf16.mxu0 0
  %1682 = vmatpush2.bf16.msra.mxu0 0
  %1683 = vmatprep.mubr.bf16.mxu0 0
  %1684 = vmatmul.mubr.bf16.gmra.mxu0 %v90
  %v1685 = vpop.f32.mrf.mxu0
  %v1686 = vadd.f32 %v1624, %v1685
  %v1687 = vpop.f32.mrf.mxu0
  %v1688 = vadd.f32 %v1628, %v1687
  %v1689 = vpop.f32.mrf.mxu0
  %v1690 = vadd.f32 %v1624, %v1689
  %v1691 = vpop.f32.mrf.mxu0
  %v1692 = vadd.f32 %v1628, %v1691
  %1693 = vmatprep.mubr.bf16.mxu0 0
  %1694 = vmatmul.mubr.bf16.gmra.mxu0 %v93
  %v1695 = vpop.f32.mrf.mxu0
  %v1696 = vadd.f32 %v1624, %v1695
  %v1697 = vpop.f32.mrf.mxu0
  %v1698 = vadd.f32 %v1628, %v1697
  %v1699 = vpop.f32.mrf.mxu0
  %v1700 = vadd.f32 %v1624, %v1699
  %v1701 = vpop.f32.mrf.mxu0
  %v1702 = vadd.f32 %v1628, %v1701
  %1703 = vmatprep.mubr.bf16.mxu0 0
  %1704 = vmatmul.mubr.bf16.gmra.mxu0 %v96
  %v1705 = vpop.f32.mrf.mxu0
  %v1706 = vadd.f32 %v1624, %v1705
  %v1707 = vpop.f32.mrf.mxu0
  %v1708 = vadd.f32 %v1628, %v1707
  %v1709 = vpop.f32.mrf.mxu0
  %v1710 = vadd.f32 %v1624, %v1709
  %v1711 = vpop.f32.mrf.mxu0
  %v1712 = vadd.f32 %v1628, %v1711
  %1713 = vmatprep.mubr.bf16.mxu0 0
  %1714 = vmatmul.mubr.bf16.gmra.mxu0 %v99
  %v1715 = vpop.f32.mrf.mxu0
  %v1716 = vadd.f32 %v1624, %v1715
  %v1717 = vpop.f32.mrf.mxu0
  %v1718 = vadd.f32 %v1628, %v1717
  %v1719 = vpop.f32.mrf.mxu0
  %v1720 = vadd.f32 %v1624, %v1719
  %v1721 = vpop.f32.mrf.mxu0
  %v1722 = vadd.f32 %v1628, %v1721
  %1723 = vmatprep.mubr.bf16.mxu0 0
  %1724 = vmatmul.mubr.bf16.gmra.mxu0 %v102
  %v1725 = vpop.f32.mrf.mxu0
  %v1726 = vadd.f32 %v1624, %v1725
  %v1727 = vpop.f32.mrf.mxu0
  %v1728 = vadd.f32 %v1628, %v1727
  %v1729 = vpop.f32.mrf.mxu0
  %v1730 = vadd.f32 %v1624, %v1729
  %v1731 = vpop.f32.mrf.mxu0
  %v1732 = vadd.f32 %v1628, %v1731
  %1733 = vmatprep.mubr.bf16.mxu0 0
  %1734 = vmatmul.mubr.bf16.gmra.mxu0 %v105
  %v1735 = vpop.f32.mrf.mxu0
  %v1736 = vadd.f32 %v1624, %v1735
  %v1737 = vpop.f32.mrf.mxu0
  %v1738 = vadd.f32 %v1628, %v1737
  %v1739 = vpop.f32.mrf.mxu0
  %v1740 = vadd.f32 %v1624, %v1739
  %v1741 = vpop.f32.mrf.mxu0
  %v1742 = vadd.f32 %v1628, %v1741
  %1743 = vmatprep.mubr.bf16.mxu0 0
  %1744 = vmatmul.mubr.bf16.gmra.mxu0 %v108
  %v1745 = vpop.f32.mrf.mxu0
  %v1746 = vadd.f32 %v1624, %v1745
  %v1747 = vpop.f32.mrf.mxu0
  %v1748 = vadd.f32 %v1628, %v1747
  %v1749 = vpop.f32.mrf.mxu0
  %v1750 = vadd.f32 %v1624, %v1749
  %v1751 = vpop.f32.mrf.mxu0
  %v1752 = vadd.f32 %v1628, %v1751
  %1753 = vmatprep.mubr.bf16.mxu0 0
  %1754 = vmatmul.mubr.bf16.gmra.mxu0 %v111
  %v1755 = vpop.f32.mrf.mxu0
  %v1756 = vadd.f32 %v1624, %v1755
  %v1757 = vpop.f32.mrf.mxu0
  %v1758 = vadd.f32 %v1628, %v1757
  %v1759 = vpop.f32.mrf.mxu0
  %v1760 = vadd.f32 %v1624, %v1759
  %v1761 = vpop.f32.mrf.mxu0
  %v1762 = vadd.f32 %v1628, %v1761
  %1763 = vdwg.mxu0
  %v1764 = vmax.f32 %v1686, 0.0
  %v1765 = vmax.f32 %v1688, 0.0
  %v1766 = vmax.f32 %v1690, 0.0
  %v1767 = vmax.f32 %v1692, 0.0
  %v1768 = vmax.f32 %v1696, 0.0
  %v1769 = vmax.f32 %v1698, 0.0
  %v1770 = vmax.f32 %v1700, 0.0
  %v1771 = vmax.f32 %v1702, 0.0
  %v1772 = vmax.f32 %v1706, 0.0
  %v1773 = vmax.f32 %v1708, 0.0
  %v1774 = vmax.f32 %v1710, 0.0
  %v1775 = vmax.f32 %v1712, 0.0
  %v1776 = vmax.f32 %v1716, 0.0
  %v1777 = vmax.f32 %v1718, 0.0
  %v1778 = vmax.f32 %v1720, 0.0
  %v1779 = vmax.f32 %v1722, 0.0
  %v1780 = vmax.f32 %v1726, 0.0
  %v1781 = vmax.f32 %v1728, 0.0
  %v1782 = vmax.f32 %v1730, 0.0
  %v1783 = vmax.f32 %v1732, 0.0
  %v1784 = vmax.f32 %v1736, 0.0
  %v1785 = vmax.f32 %v1738, 0.0
  %v1786 = vmax.f32 %v1740, 0.0
  %v1787 = vmax.f32 %v1742, 0.0
  %v1788 = vmax.f32 %v1746, 0.0
  %v1789 = vmax.f32 %v1748, 0.0
  %v1790 = vmax.f32 %v1750, 0.0
  %v1791 = vmax.f32 %v1752, 0.0
  %v1792 = vmax.f32 %v1756, 0.0
  %v1793 = vmax.f32 %v1758, 0.0
  %v1794 = vmax.f32 %v1760, 0.0
  %v1795 = vmax.f32 %v1762, 0.0
  %v1796 = vpack.c.bf16 %v1766, %v1764
  %v1797 = vpack.c.bf16 %v1767, %v1765
  %v1798 = vpack.c.bf16 %v1770, %v1768
  %v1799 = vpack.c.bf16 %v1771, %v1769
  %v1800 = vpack.c.bf16 %v1774, %v1772
  %v1801 = vpack.c.bf16 %v1775, %v1773
  %v1802 = vpack.c.bf16 %v1778, %v1776
  %v1803 = vpack.c.bf16 %v1779, %v1777
  %v1804 = vpack.c.bf16 %v1782, %v1780
  %v1805 = vpack.c.bf16 %v1783, %v1781
  %v1806 = vpack.c.bf16 %v1786, %v1784
  %v1807 = vpack.c.bf16 %v1787, %v1785
  %v1808 = vpack.c.bf16 %v1790, %v1788
  %v1809 = vpack.c.bf16 %v1791, %v1789
  %v1810 = vpack.c.bf16 %v1794, %v1792
  %v1811 = vpack.c.bf16 %v1795, %v1793
  %v1812 = vld [vmem:[%s3 + $0x300] sm:$0xff]
  %v1813 = vld [vmem:[%s3 + $0x308] sm:$0xff]
  %v1814 = vld [vmem:[%s3 + $0x310] sm:$0xff]
  %v1815 = vld [vmem:[%s3 + $0x318] sm:$0xff]
  %v1816 = vld [vmem:[%s3 + $0x320] sm:$0xff]
  %v1817 = vld [vmem:[%s3 + $0x328] sm:$0xff]
  %v1818 = vld [vmem:[%s3 + $0x330] sm:$0xff]
  %v1819 = vld [vmem:[%s3 + $0x338] sm:$0xff]
  %v1820 = vld [vmem:[%s3 + $0x340] sm:$0xff]
  %v1821 = vld [vmem:[%s3 + $0x348] sm:$0xff]
  %v1822 = vld [vmem:[%s3 + $0x350] sm:$0xff]
  %v1823 = vld [vmem:[%s3 + $0x358] sm:$0xff]
  %v1824 = vld [vmem:[%s3 + $0x360] sm:$0xff]
  %v1825 = vld [vmem:[%s3 + $0x368] sm:$0xff]
  %v1826 = vld [vmem:[%s3 + $0x370] sm:$0xff]
  %v1827 = vld [vmem:[%s3 + $0x378] sm:$0xff]
  %v1828 = vld [vmem:[%s3 + $0x380] sm:$0xff]
  %v1829 = vld [vmem:[%s3 + $0x388] sm:$0xff]
  %v1830 = vld [vmem:[%s3 + $0x390] sm:$0xff]
  %v1831 = vld [vmem:[%s3 + $0x398] sm:$0xff]
  %v1832 = vld [vmem:[%s3 + $0x3a0] sm:$0xff]
  %v1833 = vld [vmem:[%s3 + $0x3a8] sm:$0xff]
  %v1834 = vld [vmem:[%s3 + $0x3b0] sm:$0xff]
  %v1835 = vld [vmem:[%s3 + $0x3b8] sm:$0xff]
  %v1836 = vld [vmem:[%s3 + $0x3c0] sm:$0xff]
  %v1837 = vld [vmem:[%s3 + $0x3c8] sm:$0xff]
  %v1838 = vld [vmem:[%s3 + $0x3d0] sm:$0xff]
  %v1839 = vld [vmem:[%s3 + $0x3d8] sm:$0xff]
  %v1840 = vld [vmem:[%s3 + $0x3e0] sm:$0xff]
  %v1841 = vld [vmem:[%s3 + $0x3e8] sm:$0xff]
  %v1842 = vld [vmem:[%s3 + $0x3f0] sm:$0xff]
  %v1843 = vld [vmem:[%s3 + $0x3f8] sm:$0xff]
  %v1876 = vunpack.c.l.b16 %v1812
  %v1877 = vunpack.c.h.b16 %v1812
  %v1878 = vunpack.c.l.b16 %v1813
  %v1879 = vunpack.c.h.b16 %v1813
  %v1880 = vunpack.c.l.b16 %v1814
  %v1881 = vunpack.c.h.b16 %v1814
  %v1882 = vunpack.c.l.b16 %v1815
  %v1883 = vunpack.c.h.b16 %v1815
  %v1884 = vunpack.c.l.b16 %v1816
  %v1885 = vunpack.c.h.b16 %v1816
  %v1886 = vunpack.c.l.b16 %v1817
  %v1887 = vunpack.c.h.b16 %v1817
  %v1888 = vunpack.c.l.b16 %v1818
  %v1889 = vunpack.c.h.b16 %v1818
  %v1890 = vunpack.c.l.b16 %v1819
  %v1891 = vunpack.c.h.b16 %v1819
  %v1892 = vunpack.c.l.b16 %v1820
  %v1893 = vunpack.c.h.b16 %v1820
  %v1894 = vunpack.c.l.b16 %v1821
  %v1895 = vunpack.c.h.b16 %v1821
  %v1896 = vunpack.c.l.b16 %v1822
  %v1897 = vunpack.c.h.b16 %v1822
  %v1898 = vunpack.c.l.b16 %v1823
  %v1899 = vunpack.c.h.b16 %v1823
  %v1900 = vunpack.c.l.b16 %v1824
  %v1901 = vunpack.c.h.b16 %v1824
  %v1902 = vunpack.c.l.b16 %v1825
  %v1903 = vunpack.c.h.b16 %v1825
  %v1904 = vunpack.c.l.b16 %v1826
  %v1905 = vunpack.c.h.b16 %v1826
  %v1906 = vunpack.c.l.b16 %v1827
  %v1907 = vunpack.c.h.b16 %v1827
  %v1908 = vunpack.c.l.b16 %v1828
  %v1909 = vunpack.c.h.b16 %v1828
  %v1910 = vunpack.c.l.b16 %v1829
  %v1911 = vunpack.c.h.b16 %v1829
  %v1912 = vunpack.c.l.b16 %v1830
  %v1913 = vunpack.c.h.b16 %v1830
  %v1914 = vunpack.c.l.b16 %v1831
  %v1915 = vunpack.c.h.b16 %v1831
  %v1916 = vunpack.c.l.b16 %v1832
  %v1917 = vunpack.c.h.b16 %v1832
  %v1918 = vunpack.c.l.b16 %v1833
  %v1919 = vunpack.c.h.b16 %v1833
  %v1920 = vunpack.c.l.b16 %v1834
  %v1921 = vunpack.c.h.b16 %v1834
  %v1922 = vunpack.c.l.b16 %v1835
  %v1923 = vunpack.c.h.b16 %v1835
  %v1924 = vunpack.c.l.b16 %v1836
  %v1925 = vunpack.c.h.b16 %v1836
  %v1926 = vunpack.c.l.b16 %v1837
  %v1927 = vunpack.c.h.b16 %v1837
  %v1928 = vunpack.c.l.b16 %v1838
  %v1929 = vunpack.c.h.b16 %v1838
  %v1930 = vunpack.c.l.b16 %v1839
  %v1931 = vunpack.c.h.b16 %v1839
  %v1932 = vunpack.c.l.b16 %v1840
  %v1933 = vunpack.c.h.b16 %v1840
  %v1934 = vunpack.c.l.b16 %v1841
  %v1935 = vunpack.c.h.b16 %v1841
  %v1936 = vunpack.c.l.b16 %v1842
  %v1937 = vunpack.c.h.b16 %v1842
  %v1938 = vunpack.c.l.b16 %v1843
  %v1939 = vunpack.c.h.b16 %v1843
  %v1940 = vpack.c.b16 %v1878, %v1876
  %v1941 = vpack.c.b16 %v1879, %v1877
  %v1942 = vpack.c.b16 %v1882, %v1880
  %v1943 = vpack.c.b16 %v1883, %v1881
  %v1944 = vpack.c.b16 %v1886, %v1884
  %v1945 = vpack.c.b16 %v1887, %v1885
  %v1946 = vpack.c.b16 %v1890, %v1888
  %v1947 = vpack.c.b16 %v1891, %v1889
  %v1948 = vpack.c.b16 %v1894, %v1892
  %v1949 = vpack.c.b16 %v1895, %v1893
  %v1950 = vpack.c.b16 %v1898, %v1896
  %v1951 = vpack.c.b16 %v1899, %v1897
  %v1952 = vpack.c.b16 %v1902, %v1900
  %v1953 = vpack.c.b16 %v1903, %v1901
  %v1954 = vpack.c.b16 %v1906, %v1904
  %v1955 = vpack.c.b16 %v1907, %v1905
  %v1956 = vpack.c.b16 %v1910, %v1908
  %v1957 = vpack.c.b16 %v1911, %v1909
  %v1958 = vpack.c.b16 %v1914, %v1912
  %v1959 = vpack.c.b16 %v1915, %v1913
  %v1960 = vpack.c.b16 %v1918, %v1916
  %v1961 = vpack.c.b16 %v1919, %v1917
  %v1962 = vpack.c.b16 %v1922, %v1920
  %v1963 = vpack.c.b16 %v1923, %v1921
  %v1964 = vpack.c.b16 %v1926, %v1924
  %v1965 = vpack.c.b16 %v1927, %v1925
  %v1966 = vpack.c.b16 %v1930, %v1928
  %v1967 = vpack.c.b16 %v1931, %v1929
  %v1968 = vpack.c.b16 %v1934, %v1932
  %v1969 = vpack.c.b16 %v1935, %v1933
  %v1970 = vpack.c.b16 %v1938, %v1936
  %v1971 = vpack.c.b16 %v1939, %v1937
  %2004 = vmatprep.subr.bf16.mxu0 %v1955
  %2005 = vmatpush1.bf16.msra.mxu0 %v1954
  %2006 = vmatprep.subr.bf16.mxu0 %v1953
  %2007 = vmatpush1.bf16.msra.mxu0 %v1952
  %2008 = vmatprep.subr.bf16.mxu0 %v1951
  %2009 = vmatpush1.bf16.msra.mxu0 %v1950
  %2010 = vmatprep.subr.bf16.mxu0 %v1949
  %2011 = vmatpush1.bf16.msra.mxu0 %v1948
  %2012 = vmatprep.subr.bf16.mxu0 %v1947
  %2013 = vmatpush1.bf16.msra.mxu0 %v1946
  %2014 = vmatprep.subr.bf16.mxu0 %v1945
  %2015 = vmatpush1.bf16.msra.mxu0 %v1944
  %2016 = vmatprep.subr.bf16.mxu0 %v1943
  %2017 = vmatpush1.bf16.msra.mxu0 %v1942
  %2018 = vmatprep.subr.bf16.mxu0 %v1941
  %2019 = vmatpush1.bf16.msra.mxu0 %v1940
  %2020 = vmatprep.subr.bf16.mxu0 %v1971
  %2021 = vmatpush2.bf16.msra.mxu0 %v1970
  %2022 = vmatprep.subr.bf16.mxu0 %v1969
  %2023 = vmatpush2.bf16.msra.mxu0 %v1968
  %2024 = vmatprep.subr.bf16.mxu0 %v1967
  %2025 = vmatpush2.bf16.msra.mxu0 %v1966
  %2026 = vmatprep.subr.bf16.mxu0 %v1965
  %2027 = vmatpush2.bf16.msra.mxu0 %v1964
  %2028 = vmatprep.subr.bf16.mxu0 %v1963
  %2029 = vmatpush2.bf16.msra.mxu0 %v1962
  %2030 = vmatprep.subr.bf16.mxu0 %v1961
  %2031 = vmatpush2.bf16.msra.mxu0 %v1960
  %2032 = vmatprep.subr.bf16.mxu0 %v1959
  %2033 = vmatpush2.bf16.msra.mxu0 %v1958
  %2034 = vmatprep.subr.bf16.mxu0 %v1957
  %2035 = vmatpush2.bf16.msra.mxu0 %v1956
  %2036 = vmatprep.mubr.bf16.mxu0 %v1797
  %2037 = vmatmul.mubr.bf16.gmra.mxu0 %v1796
  %v2038 = vpop.f32.mrf.mxu0
  %v2039 = vadd.f32 0.0, %v2038
  %v2040 = vpop.f32.mrf.mxu0
  %v2041 = vadd.f32 0.0, %v2040
  %v2042 = vpop.f32.mrf.mxu0
  %v2043 = vadd.f32 0.0, %v2042
  %v2044 = vpop.f32.mrf.mxu0
  %v2045 = vadd.f32 0.0, %v2044
  %2046 = vmatprep.mubr.bf16.mxu0 %v1799
  %2047 = vmatmul.mubr.bf16.gmra.mxu0 %v1798
  %v2048 = vpop.f32.mrf.mxu0
  %v2049 = vadd.f32 0.0, %v2048
  %v2050 = vpop.f32.mrf.mxu0
  %v2051 = vadd.f32 0.0, %v2050
  %v2052 = vpop.f32.mrf.mxu0
  %v2053 = vadd.f32 0.0, %v2052
  %v2054 = vpop.f32.mrf.mxu0
  %v2055 = vadd.f32 0.0, %v2054
  %2056 = vmatprep.mubr.bf16.mxu0 %v1801
  %2057 = vmatmul.mubr.bf16.gmra.mxu0 %v1800
  %v2058 = vpop.f32.mrf.mxu0
  %v2059 = vadd.f32 0.0, %v2058
  %v2060 = vpop.f32.mrf.mxu0
  %v2061 = vadd.f32 0.0, %v2060
  %v2062 = vpop.f32.mrf.mxu0
  %v2063 = vadd.f32 0.0, %v2062
  %v2064 = vpop.f32.mrf.mxu0
  %v2065 = vadd.f32 0.0, %v2064
  %2066 = vmatprep.mubr.bf16.mxu0 %v1803
  %2067 = vmatmul.mubr.bf16.gmra.mxu0 %v1802
  %v2068 = vpop.f32.mrf.mxu0
  %v2069 = vadd.f32 0.0, %v2068
  %v2070 = vpop.f32.mrf.mxu0
  %v2071 = vadd.f32 0.0, %v2070
  %v2072 = vpop.f32.mrf.mxu0
  %v2073 = vadd.f32 0.0, %v2072
  %v2074 = vpop.f32.mrf.mxu0
  %v2075 = vadd.f32 0.0, %v2074
  %2076 = vmatprep.mubr.bf16.mxu0 %v1805
  %2077 = vmatmul.mubr.bf16.gmra.mxu0 %v1804
  %v2078 = vpop.f32.mrf.mxu0
  %v2079 = vadd.f32 0.0, %v2078
  %v2080 = vpop.f32.mrf.mxu0
  %v2081 = vadd.f32 0.0, %v2080
  %v2082 = vpop.f32.mrf.mxu0
  %v2083 = vadd.f32 0.0, %v2082
  %v2084 = vpop.f32.mrf.mxu0
  %v2085 = vadd.f32 0.0, %v2084
  %2086 = vmatprep.mubr.bf16.mxu0 %v1807
  %2087 = vmatmul.mubr.bf16.gmra.mxu0 %v1806
  %v2088 = vpop.f32.mrf.mxu0
  %v2089 = vadd.f32 0.0, %v2088
  %v2090 = vpop.f32.mrf.mxu0
  %v2091 = vadd.f32 0.0, %v2090
  %v2092 = vpop.f32.mrf.mxu0
  %v2093 = vadd.f32 0.0, %v2092
  %v2094 = vpop.f32.mrf.mxu0
  %v2095 = vadd.f32 0.0, %v2094
  %2096 = vmatprep.mubr.bf16.mxu0 %v1809
  %2097 = vmatmul.mubr.bf16.gmra.mxu0 %v1808
  %v2098 = vpop.f32.mrf.mxu0
  %v2099 = vadd.f32 0.0, %v2098
  %v2100 = vpop.f32.mrf.mxu0
  %v2101 = vadd.f32 0.0, %v2100
  %v2102 = vpop.f32.mrf.mxu0
  %v2103 = vadd.f32 0.0, %v2102
  %v2104 = vpop.f32.mrf.mxu0
  %v2105 = vadd.f32 0.0, %v2104
  %2106 = vmatprep.mubr.bf16.mxu0 %v1811
  %2107 = vmatmul.mubr.bf16.gmra.mxu0 %v1810
  %v2108 = vpop.f32.mrf.mxu0
  %v2109 = vadd.f32 0.0, %v2108
  %v2110 = vpop.f32.mrf.mxu0
  %v2111 = vadd.f32 0.0, %v2110
  %v2112 = vpop.f32.mrf.mxu0
  %v2113 = vadd.f32 0.0, %v2112
  %v2114 = vpop.f32.mrf.mxu0
  %v2115 = vadd.f32 0.0, %v2114
  %2116 = vdwg.mxu0
  %v2117 = vadd.f32 %v1583, %v2039
  %v2118 = vadd.f32 %v1584, %v2041
  %v2119 = vadd.f32 %v1585, %v2043
  %v2120 = vadd.f32 %v1586, %v2045
  %v2121 = vadd.f32 %v1587, %v2049
  %v2122 = vadd.f32 %v1588, %v2051
  %v2123 = vadd.f32 %v1589, %v2053
  %v2124 = vadd.f32 %v1590, %v2055
  %v2125 = vadd.f32 %v1591, %v2059
  %v2126 = vadd.f32 %v1592, %v2061
  %v2127 = vadd.f32 %v1593, %v2063
  %v2128 = vadd.f32 %v1594, %v2065
  %v2129 = vadd.f32 %v1595, %v2069
  %v2130 = vadd.f32 %v1596, %v2071
  %v2131 = vadd.f32 %v1597, %v2073
  %v2132 = vadd.f32 %v1598, %v2075
  %v2133 = vadd.f32 %v1599, %v2079
  %v2134 = vadd.f32 %v1600, %v2081
  %v2135 = vadd.f32 %v1601, %v2083
  %v2136 = vadd.f32 %v1602, %v2085
  %v2137 = vadd.f32 %v1603, %v2089
  %v2138 = vadd.f32 %v1604, %v2091
  %v2139 = vadd.f32 %v1605, %v2093
  %v2140 = vadd.f32 %v1606, %v2095
  %v2141 = vadd.f32 %v1607, %v2099
  %v2142 = vadd.f32 %v1608, %v2101
  %v2143 = vadd.f32 %v1609, %v2103
  %v2144 = vadd.f32 %v1610, %v2105
  %v2145 = vadd.f32 %v1611, %v2109
  %v2146 = vadd.f32 %v1612, %v2111
  %v2147 = vadd.f32 %v1613, %v2113
  %v2148 = vadd.f32 %v1614, %v2115
  %v2149 = vld [vmem:[%s4] sm:$0x3]
  %v2151 = vlaneseq
  %v2152 = vshrl.u32 %v2151, 7
  %v2153 = vsub.s32 0, %v2152
  %v2154 = vrot.slane %v2149, %v2153
  %v2155 = vlaneseq
  %v2156 = vshrl.u32 %v2155, 7
  %v2157 = vsub.s32 1, %v2156
  %v2158 = vrot.slane %v2149, %v2157
  %v2161 = vadd.f32 %v2117, %v2154
  %v2162 = vadd.f32 %v2118, %v2158
  %v2163 = vadd.f32 %v2119, %v2154
  %v2164 = vadd.f32 %v2120, %v2158
  %v2165 = vadd.f32 %v2121, %v2154
  %v2166 = vadd.f32 %v2122, %v2158
  %v2167 = vadd.f32 %v2123, %v2154
  %v2168 = vadd.f32 %v2124, %v2158
  %v2169 = vadd.f32 %v2125, %v2154
  %v2170 = vadd.f32 %v2126, %v2158
  %v2171 = vadd.f32 %v2127, %v2154
  %v2172 = vadd.f32 %v2128, %v2158
  %v2173 = vadd.f32 %v2129, %v2154
  %v2174 = vadd.f32 %v2130, %v2158
  %v2175 = vadd.f32 %v2131, %v2154
  %v2176 = vadd.f32 %v2132, %v2158
  %v2177 = vadd.f32 %v2133, %v2154
  %v2178 = vadd.f32 %v2134, %v2158
  %v2179 = vadd.f32 %v2135, %v2154
  %v2180 = vadd.f32 %v2136, %v2158
  %v2181 = vadd.f32 %v2137, %v2154
  %v2182 = vadd.f32 %v2138, %v2158
  %v2183 = vadd.f32 %v2139, %v2154
  %v2184 = vadd.f32 %v2140, %v2158
  %v2185 = vadd.f32 %v2141, %v2154
  %v2186 = vadd.f32 %v2142, %v2158
  %v2187 = vadd.f32 %v2143, %v2154
  %v2188 = vadd.f32 %v2144, %v2158
  %v2189 = vadd.f32 %v2145, %v2154
  %v2190 = vadd.f32 %v2146, %v2158
  %v2191 = vadd.f32 %v2147, %v2154
  %v2192 = vadd.f32 %v2148, %v2158
  %v2193 = vmax.f32 %v2161, 0.0
  %v2194 = vmax.f32 %v2162, 0.0
  %v2195 = vmax.f32 %v2163, 0.0
  %v2196 = vmax.f32 %v2164, 0.0
  %v2197 = vmax.f32 %v2165, 0.0
  %v2198 = vmax.f32 %v2166, 0.0
  %v2199 = vmax.f32 %v2167, 0.0
  %v2200 = vmax.f32 %v2168, 0.0
  %v2201 = vmax.f32 %v2169, 0.0
  %v2202 = vmax.f32 %v2170, 0.0
  %v2203 = vmax.f32 %v2171, 0.0
  %v2204 = vmax.f32 %v2172, 0.0
  %v2205 = vmax.f32 %v2173, 0.0
  %v2206 = vmax.f32 %v2174, 0.0
  %v2207 = vmax.f32 %v2175, 0.0
  %v2208 = vmax.f32 %v2176, 0.0
  %v2209 = vmax.f32 %v2177, 0.0
  %v2210 = vmax.f32 %v2178, 0.0
  %v2211 = vmax.f32 %v2179, 0.0
  %v2212 = vmax.f32 %v2180, 0.0
  %v2213 = vmax.f32 %v2181, 0.0
  %v2214 = vmax.f32 %v2182, 0.0
  %v2215 = vmax.f32 %v2183, 0.0
  %v2216 = vmax.f32 %v2184, 0.0
  %v2217 = vmax.f32 %v2185, 0.0
  %v2218 = vmax.f32 %v2186, 0.0
  %v2219 = vmax.f32 %v2187, 0.0
  %v2220 = vmax.f32 %v2188, 0.0
  %v2221 = vmax.f32 %v2189, 0.0
  %v2222 = vmax.f32 %v2190, 0.0
  %v2223 = vmax.f32 %v2191, 0.0
  %v2224 = vmax.f32 %v2192, 0.0
  %v2225 = vld [vmem:[%s5] sm:$0x3]
  %v2227 = vlaneseq
  %v2228 = vshrl.u32 %v2227, 7
  %v2229 = vsub.s32 0, %v2228
  %v2230 = vrot.slane %v2225, %v2229
  %v2231 = vlaneseq
  %v2232 = vshrl.u32 %v2231, 7
  %v2233 = vsub.s32 1, %v2232
  %v2234 = vrot.slane %v2225, %v2233
  %v2237 = vmul.f32 %v2193, %v2230
  %v2238 = vmul.f32 %v2194, %v2234
  %v2239 = vmul.f32 %v2195, %v2230
  %v2240 = vmul.f32 %v2196, %v2234
  %v2241 = vmul.f32 %v2197, %v2230
  %v2242 = vmul.f32 %v2198, %v2234
  %v2243 = vmul.f32 %v2199, %v2230
  %v2244 = vmul.f32 %v2200, %v2234
  %v2245 = vmul.f32 %v2201, %v2230
  %v2246 = vmul.f32 %v2202, %v2234
  %v2247 = vmul.f32 %v2203, %v2230
  %v2248 = vmul.f32 %v2204, %v2234
  %v2249 = vmul.f32 %v2205, %v2230
  %v2250 = vmul.f32 %v2206, %v2234
  %v2251 = vmul.f32 %v2207, %v2230
  %v2252 = vmul.f32 %v2208, %v2234
  %v2253 = vmul.f32 %v2209, %v2230
  %v2254 = vmul.f32 %v2210, %v2234
  %v2255 = vmul.f32 %v2211, %v2230
  %v2256 = vmul.f32 %v2212, %v2234
  %v2257 = vmul.f32 %v2213, %v2230
  %v2258 = vmul.f32 %v2214, %v2234
  %v2259 = vmul.f32 %v2215, %v2230
  %v2260 = vmul.f32 %v2216, %v2234
  %v2261 = vmul.f32 %v2217, %v2230
  %v2262 = vmul.f32 %v2218, %v2234
  %v2263 = vmul.f32 %v2219, %v2230
  %v2264 = vmul.f32 %v2220, %v2234
  %v2265 = vmul.f32 %v2221, %v2230
  %v2266 = vmul.f32 %v2222, %v2234
  %v2267 = vmul.f32 %v2223, %v2230
  %v2268 = vmul.f32 %v2224, %v2234
  %v2269 = vadd.f32 %v2237, %v2238
  %2270 = vadd.xlane.f32.xlu0 %v2269
  %v2271 = vpop.xlane.xlu0 %2270
  %v2272 = vadd.f32 %v2239, %v2240
  %2273 = vadd.xlane.f32.xlu0 %v2272
  %v2274 = vpop.xlane.xlu0 %2273
  %v2275 = vadd.f32 %v2241, %v2242
  %2276 = vadd.xlane.f32.xlu0 %v2275
  %v2277 = vpop.xlane.xlu0 %2276
  %v2278 = vadd.f32 %v2243, %v2244
  %2279 = vadd.xlane.f32.xlu0 %v2278
  %v2280 = vpop.xlane.xlu0 %2279
  %v2281 = vadd.f32 %v2245, %v2246
  %2282 = vadd.xlane.f32.xlu0 %v2281
  %v2283 = vpop.xlane.xlu0 %2282
  %v2284 = vadd.f32 %v2247, %v2248
  %2285 = vadd.xlane.f32.xlu0 %v2284
  %v2286 = vpop.xlane.xlu0 %2285
  %v2287 = vadd.f32 %v2249, %v2250
  %2288 = vadd.xlane.f32.xlu0 %v2287
  %v2289 = vpop.xlane.xlu0 %2288
  %v2290 = vadd.f32 %v2251, %v2252
  %2291 = vadd.xlane.f32.xlu0 %v2290
  %v2292 = vpop.xlane.xlu0 %2291
  %v2293 = vadd.f32 %v2253, %v2254
  %2294 = vadd.xlane.f32.xlu0 %v2293
  %v2295 = vpop.xlane.xlu0 %2294
  %v2296 = vadd.f32 %v2255, %v2256
  %2297 = vadd.xlane.f32.xlu0 %v2296
  %v2298 = vpop.xlane.xlu0 %2297
  %v2299 = vadd.f32 %v2257, %v2258
  %2300 = vadd.xlane.f32.xlu0 %v2299
  %v2301 = vpop.xlane.xlu0 %2300
  %v2302 = vadd.f32 %v2259, %v2260
  %2303 = vadd.xlane.f32.xlu0 %v2302
  %v2304 = vpop.xlane.xlu0 %2303
  %v2305 = vadd.f32 %v2261, %v2262
  %2306 = vadd.xlane.f32.xlu0 %v2305
  %v2307 = vpop.xlane.xlu0 %2306
  %v2308 = vadd.f32 %v2263, %v2264
  %2309 = vadd.xlane.f32.xlu0 %v2308
  %v2310 = vpop.xlane.xlu0 %2309
  %v2311 = vadd.f32 %v2265, %v2266
  %2312 = vadd.xlane.f32.xlu0 %v2311
  %v2313 = vpop.xlane.xlu0 %2312
  %v2314 = vadd.f32 %v2267, %v2268
  %2315 = vadd.xlane.f32.xlu0 %v2314
  %v2316 = vpop.xlane.xlu0 %2315
  %s2317 = sld [smem:[#allocation2]]
  %v2318 = vstv %s2317
  %v2319 = vadd.f32 %v2271, %v2318
  %v2320 = vadd.f32 %v2274, %v2318
  %v2321 = vadd.f32 %v2277, %v2318
  %v2322 = vadd.f32 %v2280, %v2318
  %v2323 = vadd.f32 %v2283, %v2318
  %v2324 = vadd.f32 %v2286, %v2318
  %v2325 = vadd.f32 %v2289, %v2318
  %v2326 = vadd.f32 %v2292, %v2318
  %v2327 = vadd.f32 %v2295, %v2318
  %v2328 = vadd.f32 %v2298, %v2318
  %v2329 = vadd.f32 %v2301, %v2318
  %v2330 = vadd.f32 %v2304, %v2318
  %v2331 = vadd.f32 %v2307, %v2318
  %v2332 = vadd.f32 %v2310, %v2318
  %v2333 = vadd.f32 %v2313, %v2318
  %v2334 = vadd.f32 %v2316, %v2318
  %v2335 = vxor.u32 %v2319, 2147483648
  %v2336 = vxor.u32 %v2320, 2147483648
  %v2337 = vxor.u32 %v2321, 2147483648
  %v2338 = vxor.u32 %v2322, 2147483648
  %v2339 = vxor.u32 %v2323, 2147483648
  %v2340 = vxor.u32 %v2324, 2147483648
  %v2341 = vxor.u32 %v2325, 2147483648
  %v2342 = vxor.u32 %v2326, 2147483648
  %v2343 = vxor.u32 %v2327, 2147483648
  %v2344 = vxor.u32 %v2328, 2147483648
  %v2345 = vxor.u32 %v2329, 2147483648
  %v2346 = vxor.u32 %v2330, 2147483648
  %v2347 = vxor.u32 %v2331, 2147483648
  %v2348 = vxor.u32 %v2332, 2147483648
  %v2349 = vxor.u32 %v2333, 2147483648
  %v2350 = vxor.u32 %v2334, 2147483648
  %v2351 = vmul.f32 %v2335, 1.442695
  %v2352 = vpow.pop %v2351
  %v2353 = vmul.f32 %v2336, 1.442695
  %v2354 = vpow.pop %v2353
  %v2355 = vmul.f32 %v2337, 1.442695
  %v2356 = vpow.pop %v2355
  %v2357 = vmul.f32 %v2338, 1.442695
  %v2358 = vpow.pop %v2357
  %v2359 = vmul.f32 %v2339, 1.442695
  %v2360 = vpow.pop %v2359
  %v2361 = vmul.f32 %v2340, 1.442695
  %v2362 = vpow.pop %v2361
  %v2363 = vmul.f32 %v2341, 1.442695
  %v2364 = vpow.pop %v2363
  %v2365 = vmul.f32 %v2342, 1.442695
  %v2366 = vpow.pop %v2365
  %v2367 = vmul.f32 %v2343, 1.442695
  %v2368 = vpow.pop %v2367
  %v2369 = vmul.f32 %v2344, 1.442695
  %v2370 = vpow.pop %v2369
  %v2371 = vmul.f32 %v2345, 1.442695
  %v2372 = vpow.pop %v2371
  %v2373 = vmul.f32 %v2346, 1.442695
  %v2374 = vpow.pop %v2373
  %v2375 = vmul.f32 %v2347, 1.442695
  %v2376 = vpow.pop %v2375
  %v2377 = vmul.f32 %v2348, 1.442695
  %v2378 = vpow.pop %v2377
  %v2379 = vmul.f32 %v2349, 1.442695
  %v2380 = vpow.pop %v2379
  %v2381 = vmul.f32 %v2350, 1.442695
  %v2382 = vpow.pop %v2381
  %v2383 = vadd.f32 %v2352, 1.0
  %v2384 = vadd.f32 %v2354, 1.0
  %v2385 = vadd.f32 %v2356, 1.0
  %v2386 = vadd.f32 %v2358, 1.0
  %v2387 = vadd.f32 %v2360, 1.0
  %v2388 = vadd.f32 %v2362, 1.0
  %v2389 = vadd.f32 %v2364, 1.0
  %v2390 = vadd.f32 %v2366, 1.0
  %v2391 = vadd.f32 %v2368, 1.0
  %v2392 = vadd.f32 %v2370, 1.0
  %v2393 = vadd.f32 %v2372, 1.0
  %v2394 = vadd.f32 %v2374, 1.0
  %v2395 = vadd.f32 %v2376, 1.0
  %v2396 = vadd.f32 %v2378, 1.0
  %v2397 = vadd.f32 %v2380, 1.0
  %v2398 = vadd.f32 %v2382, 1.0
  %v2399 = vrcp.pop %v2383
  %v2400 = vmul.f32 1.0, %v2399
  %v2401 = vrcp.pop %v2384
  %v2402 = vmul.f32 1.0, %v2401
  %v2403 = vrcp.pop %v2385
  %v2404 = vmul.f32 1.0, %v2403
  %v2405 = vrcp.pop %v2386
  %v2406 = vmul.f32 1.0, %v2405
  %v2407 = vrcp.pop %v2387
  %v2408 = vmul.f32 1.0, %v2407
  %v2409 = vrcp.pop %v2388
  %v2410 = vmul.f32 1.0, %v2409
  %v2411 = vrcp.pop %v2389
  %v2412 = vmul.f32 1.0, %v2411
  %v2413 = vrcp.pop %v2390
  %v2414 = vmul.f32 1.0, %v2413
  %v2415 = vrcp.pop %v2391
  %v2416 = vmul.f32 1.0, %v2415
  %v2417 = vrcp.pop %v2392
  %v2418 = vmul.f32 1.0, %v2417
  %v2419 = vrcp.pop %v2393
  %v2420 = vmul.f32 1.0, %v2419
  %v2421 = vrcp.pop %v2394
  %v2422 = vmul.f32 1.0, %v2421
  %v2423 = vrcp.pop %v2395
  %v2424 = vmul.f32 1.0, %v2423
  %v2425 = vrcp.pop %v2396
  %v2426 = vmul.f32 1.0, %v2425
  %v2427 = vrcp.pop %v2397
  %v2428 = vmul.f32 1.0, %v2427
  %v2429 = vrcp.pop %v2398
  %v2430 = vmul.f32 1.0, %v2429
  %v2447 = vlaneseq
  %v2448 = vand.u32 %v2447, 127
  %v2449 = vlaneseq
  %v2450 = vshrl.u32 %v2449, 7
  %v2451 = vsub.s32 %v2448, %v2450
  %v2452 = vrot.slane %v2400, %v2451
  %v2453 = vadd.s32 %v2448, 4294967288
  %v2454 = vlaneseq
  %v2455 = vshrl.u32 %v2454, 7
  %v2456 = vsub.s32 %v2453, %v2455
  %v2457 = vrot.slane %v2402, %v2456
  %vm2458 = vcmask 130112
  %v2459 = vsel %vm2458, %v2457, %v2452
  %v2460 = vadd.s32 %v2448, 4294967280
  %v2461 = vlaneseq
  %v2462 = vshrl.u32 %v2461, 7
  %v2463 = vsub.s32 %v2460, %v2462
  %v2464 = vrot.slane %v2404, %v2463
  %vm2465 = vcmask 195712
  %v2466 = vsel %vm2465, %v2464, %v2459
  %v2467 = vadd.s32 %v2448, 4294967272
  %v2468 = vlaneseq
  %v2469 = vshrl.u32 %v2468, 7
  %v2470 = vsub.s32 %v2467, %v2469
  %v2471 = vrot.slane %v2406, %v2470
  %vm2472 = vcmask 261312
  %v2473 = vsel %vm2472, %v2471, %v2466
  %v2474 = vadd.s32 %v2448, 4294967264
  %v2475 = vlaneseq
  %v2476 = vshrl.u32 %v2475, 7
  %v2477 = vsub.s32 %v2474, %v2476
  %v2478 = vrot.slane %v2408, %v2477
  %vm2479 = vcmask 326912
  %v2480 = vsel %vm2479, %v2478, %v2473
  %v2481 = vadd.s32 %v2448, 4294967256
  %v2482 = vlaneseq
  %v2483 = vshrl.u32 %v2482, 7
  %v2484 = vsub.s32 %v2481, %v2483
  %v2485 = vrot.slane %v2410, %v2484
  %vm2486 = vcmask 392512
  %v2487 = vsel %vm2486, %v2485, %v2480
  %v2488 = vadd.s32 %v2448, 4294967248
  %v2489 = vlaneseq
  %v2490 = vshrl.u32 %v2489, 7
  %v2491 = vsub.s32 %v2488, %v2490
  %v2492 = vrot.slane %v2412, %v2491
  %vm2493 = vcmask 458112
  %v2494 = vsel %vm2493, %v2492, %v2487
  %v2495 = vadd.s32 %v2448, 4294967240
  %v2496 = vlaneseq
  %v2497 = vshrl.u32 %v2496, 7
  %v2498 = vsub.s32 %v2495, %v2497
  %v2499 = vrot.slane %v2414, %v2498
  %vm2500 = vcmask 523712
  %v2501 = vsel %vm2500, %v2499, %v2494
  %v2502 = vadd.s32 %v2448, 4294967232
  %v2503 = vlaneseq
  %v2504 = vshrl.u32 %v2503, 7
  %v2505 = vsub.s32 %v2502, %v2504
  %v2506 = vrot.slane %v2416, %v2505
  %vm2507 = vcmask 589312
  %v2508 = vsel %vm2507, %v2506, %v2501
  %v2509 = vadd.s32 %v2448, 4294967224
  %v2510 = vlaneseq
  %v2511 = vshrl.u32 %v2510, 7
  %v2512 = vsub.s32 %v2509, %v2511
  %v2513 = vrot.slane %v2418, %v2512
  %vm2514 = vcmask 654912
  %v2515 = vsel %vm2514, %v2513, %v2508
  %v2516 = vadd.s32 %v2448, 4294967216
  %v2517 = vlaneseq
  %v2518 = vshrl.u32 %v2517, 7
  %v2519 = vsub.s32 %v2516, %v2518
  %v2520 = vrot.slane %v2420, %v2519
  %vm2521 = vcmask 720512
  %v2522 = vsel %vm2521, %v2520, %v2515
  %v2523 = vadd.s32 %v2448, 4294967208
  %v2524 = vlaneseq
  %v2525 = vshrl.u32 %v2524, 7
  %v2526 = vsub.s32 %v2523, %v2525
  %v2527 = vrot.slane %v2422, %v2526
  %vm2528 = vcmask 786112
  %v2529 = vsel %vm2528, %v2527, %v2522
  %v2530 = vadd.s32 %v2448, 4294967200
  %v2531 = vlaneseq
  %v2532 = vshrl.u32 %v2531, 7
  %v2533 = vsub.s32 %v2530, %v2532
  %v2534 = vrot.slane %v2424, %v2533
  %vm2535 = vcmask 851712
  %v2536 = vsel %vm2535, %v2534, %v2529
  %v2537 = vadd.s32 %v2448, 4294967192
  %v2538 = vlaneseq
  %v2539 = vshrl.u32 %v2538, 7
  %v2540 = vsub.s32 %v2537, %v2539
  %v2541 = vrot.slane %v2426, %v2540
  %vm2542 = vcmask 917312
  %v2543 = vsel %vm2542, %v2541, %v2536
  %v2544 = vadd.s32 %v2448, 4294967184
  %v2545 = vlaneseq
  %v2546 = vshrl.u32 %v2545, 7
  %v2547 = vsub.s32 %v2544, %v2546
  %v2548 = vrot.slane %v2428, %v2547
  %vm2549 = vcmask 982912
  %v2550 = vsel %vm2549, %v2548, %v2543
  %v2551 = vadd.s32 %v2448, 4294967176
  %v2552 = vlaneseq
  %v2553 = vshrl.u32 %v2552, 7
  %v2554 = vsub.s32 %v2551, %v2553
  %v2555 = vrot.slane %v2430, %v2554
  %vm2556 = vcmask 1048512
  %v2557 = vsel %vm2556, %v2555, %v2550
  %2559 = vst [vmem:[%s7] sm:$0x1] %v2557
  // Predicated region
  $region30: #{discrimentor_forward.1} parent=0 // pred_check
    _
  $region31: #{discrimentor_forward.1} parent=0 // pred_check_branch
    %2561 = sbr.rel (0) target = $region33
  $region32: #{discrimentor_forward.1} parent=0 // pred_region
    _
  $region33: #{discrimentor_forward.1} parent=0 // pred_fallthru
    _
  // Predicated region
  $region34: #{discrimentor_forward.1} parent=0 // pred_check
    _
  $region35: #{discrimentor_forward.1} parent=0 // pred_check_branch
    %2563 = sbr.rel (0) target = $region37
  $region36: #{discrimentor_forward.1} parent=0 // pred_region
    _
  $region37: #{discrimentor_forward.1} parent=0 // pred_fallthru
    _

</llo_original>
